<compile_context>
chip_gen: v5e
topology: v5e:2x2
jax: 0.10.0
libtpu: 0.0.40
codegen_flags: <defaults>
</compile_context>

<pallas_src>
import functools

import jax
import jax.numpy as jnp
import numpy as np
from jax import lax
from jax.experimental import pallas as pl
from jax.experimental.pallas import tpu as pltpu


def _easylstm_kernel(num_layers, hidden, seq, batch, xproj_ref, whh0_ref, *refs):
    # refs = [wih_t_1, whh_t_1, b_1, ..., wih_t_{L-1}, whh_t_{L-1}, b_{L-1},
    #         fc1_wT, fc1_b, cls_wT, cls_b, out_ref]
    H, B, L = hidden, batch, num_layers
    f32, bf16 = jnp.float32, jnp.bfloat16

    n_mid = 3 * (L - 1)
    mid = refs[:n_mid]
    fc1_w_ref, fc1_b_ref, cls_w_ref, cls_b_ref, out_ref = refs[n_mid:n_mid + 5]

    # Time-invariant weights: read once, stay in vregs across the unrolled loop.
    whh0_t = whh0_ref[...]                                    # (H, 4H)  bf16
    wih_t = [mid[3 * i][...] for i in range(L - 1)]           # (H, 4H)  bf16
    whh_t = [mid[3 * i + 1][...] for i in range(L - 1)]       # (H, 4H)  bf16
    b_comb = [mid[3 * i + 2][...] for i in range(L - 1)]      # (1, 4H)  f32

    # All timesteps' layer-0 projections: (seq*batch, 4H) f32, a couple of vregs.
    xp_all = xproj_ref[...]

    # Lane mask that doubles the g-gate block so one full-width sigmoid gives
    # tanh(g) = 2*sigmoid(2g) - 1 (one EUP push per layer per step instead of two).
    col = lax.broadcasted_iota(jnp.int32, (1, 4 * H), 1)
    g_scale = jnp.where((col >= 2 * H) & (col < 3 * H), f32(2.0), f32(1.0))

    def gates_to_state(gates, c_prev):
        sg = jax.nn.sigmoid(gates * g_scale)           # (B, 4H) f32, one EUP pass
        i_g = sg[:, 0 * H:1 * H]
        f_g = sg[:, 1 * H:2 * H]
        g_g = 2.0 * sg[:, 2 * H:3 * H] - 1.0           # == tanh(g pre-activation)
        o_g = sg[:, 3 * H:4 * H]
        c_new = f_g * c_prev + i_g * g_g               # f32 cell state
        h_new = o_g * jnp.tanh(c_new)                  # f32 elementwise / EUP
        # h is only ever consumed by matmuls -> carry it as bf16 (MXU operand).
        return h_new.astype(bf16), c_new

    hs = [jnp.zeros((B, H), bf16) for _ in range(L)]
    cs = [jnp.zeros((B, H), f32) for _ in range(L)]

    # Static (fully unrolled) time loop; seq is small and static.
    # TODO(synk): for seq >> 32, switch to lax.fori_loop(..., unroll=4) to bound
    # vreg live ranges instead of full unroll.
    for t in range(seq):
        # Layer 0: input projection precomputed; only the recurrent dot here.
        gates = xp_all[t * B:(t + 1) * B, :] + jnp.dot(
            hs[0], whh0_t, preferred_element_type=f32)
        hs[0], cs[0] = gates_to_state(gates, cs[0])

        # Layers >= 1: two independent dots (no lane concat on the serial chain).
        for l in range(1, L):
            gates = (jnp.dot(hs[l - 1], wih_t[l - 1], preferred_element_type=f32)
                     + jnp.dot(hs[l], whh_t[l - 1], preferred_element_type=f32)
                     + b_comb[l - 1])
            hs[l], cs[l] = gates_to_state(gates, cs[l])

    # Heads (once, after the recurrence): FC_1 = Linear+Sigmoid, FC_cls = Linear,
    # applied to the top layer's last-timestep hidden state.
    fc = jax.nn.sigmoid(
        jnp.dot(hs[L - 1], fc1_w_ref[...], preferred_element_type=f32)
        + fc1_b_ref[...])
    out = (jnp.dot(fc.astype(bf16), cls_w_ref[...], preferred_element_type=f32)
           + cls_b_ref[...])
    out_ref[...] = out.astype(out_ref.dtype)


def easylstm_forward(x, params, num_layers, hidden):
    """x: (batch, seq, in_) float32. Returns (batch, cls_num) float32."""
    batch, seq, _ = x.shape
    L, H = num_layers, hidden
    fc1 = params["fc1_w"].shape[0]
    cls_num = params["cls_w"].shape[0]
    f32, bf16 = jnp.float32, jnp.bfloat16

    x = x.astype(f32)
    wih0, whh0, bih0, bhh0 = params["lstm"][0]

    # Layer-0 input projection for all timesteps (no sequential dependence):
    # one matmul; (seq*batch, 4H) lane/sublane-dense layout; both biases folded.
    xproj = (jnp.einsum("bti,gi->tbg", x, wih0).reshape(seq * batch, 4 * H)
             + (bih0 + bhh0).reshape(1, 4 * H)).astype(f32)

    kernel_inputs = [xproj, whh0.T.astype(bf16)]
    for l in range(1, L):
        wih, whh, bih, bhh = params["lstm"][l]
        kernel_inputs += [wih.T.astype(bf16),
                          whh.T.astype(bf16),
                          (bih + bhh).reshape(1, 4 * H).astype(f32)]
    kernel_inputs += [params["fc1_w"].T.astype(bf16),
                      params["fc1_b"].reshape(1, fc1).astype(f32),
                      params["cls_w"].T.astype(bf16),
                      params["cls_b"].reshape(1, cls_num).astype(f32)]

    kernel = functools.partial(_easylstm_kernel, L, H, seq, batch)
    vmem = pl.BlockSpec(memory_space=pltpu.MemorySpace.VMEM)

    # No grid: single invocation, everything resident in VMEM (working set << 1 MiB).
    return pl.pallas_call(
        kernel,
        out_shape=jax.ShapeDtypeStruct((batch, cls_num), f32),
        in_specs=[vmem] * len(kernel_inputs),
        out_specs=vmem,
    )(*kernel_inputs)


# jit the whole thing (wrapper packing + pallas_call fuse into one dispatch);
# num_layers / hidden are Python-loop bounds -> static.
easylstm_forward_jit = jax.jit(easylstm_forward, static_argnums=(2, 3))


def reference_forward(x, params, num_layers, hidden):
    """Pure-JAX f32 reference of the PyTorch forward (for verification)."""
    batch, seq, _ = x.shape
    L, H = num_layers, hidden
    xs = jnp.transpose(x, (1, 0, 2)).astype(jnp.float32)
    h = [jnp.zeros((batch, H), jnp.float32) for _ in range(L)]
    c = [jnp.zeros((batch, H), jnp.float32) for _ in range(L)]
    for t in range(seq):
        inp = xs[t]
        for l in range(L):
            wih, whh, bih, bhh = params["lstm"][l]
            gates = inp @ wih.T + h[l] @ whh.T + bih + bhh
            i_g = jax.nn.sigmoid(gates[:, :H])
            f_g = jax.nn.sigmoid(gates[:, H:2 * H])
            g_g = jnp.tanh(gates[:, 2 * H:3 * H])
            o_g = jax.nn.sigmoid(gates[:, 3 * H:])
            c[l] = f_g * c[l] + i_g * g_g
            h[l] = o_g * jnp.tanh(c[l])
            inp = h[l]
    fc = jax.nn.sigmoid(inp @ params["fc1_w"].T + params["fc1_b"])
    return fc @ params["cls_w"].T + params["cls_b"]


def init_params(key, in_, lstm_layers, hidden, fc_1, cls_num):
    """Deterministic synthetic init (PyTorch-style uniform ranges); arrays only."""
    params = {"lstm": []}
    k_lstm = 1.0 / np.sqrt(hidden)
    for l in range(lstm_layers):
        in_size = in_ if l == 0 else hidden
        key, k1, k2, k3, k4 = jax.random.split(key, 5)
        params["lstm"].append((
            jax.random.uniform(k1, (4 * hidden, in_size), jnp.float32, -k_lstm, k_lstm),
            jax.random.uniform(k2, (4 * hidden, hidden), jnp.float32, -k_lstm, k_lstm),
            jax.random.uniform(k3, (4 * hidden,), jnp.float32, -k_lstm, k_lstm),
            jax.random.uniform(k4, (4 * hidden,), jnp.float32, -k_lstm, k_lstm),
        ))
    key, k1, k2, k3, k4 = jax.random.split(key, 5)
    k_fc1 = 1.0 / np.sqrt(hidden)
    k_cls = 1.0 / np.sqrt(fc_1)
    params["fc1_w"] = jax.random.uniform(k1, (fc_1, hidden), jnp.float32, -k_fc1, k_fc1)
    params["fc1_b"] = jax.random.uniform(k2, (fc_1,), jnp.float32, -k_fc1, k_fc1)
    params["cls_w"] = jax.random.uniform(k3, (cls_num, fc_1), jnp.float32, -k_cls, k_cls)
    params["cls_b"] = jax.random.uniform(k4, (cls_num,), jnp.float32, -k_cls, k_cls)
    return params


if __name__ == "__main__":
    # Small shapes consistent with the module's forward: (batch, seq, 3).
    batch, seq, in_ = 2, 8, 3
    lstm_layers, hidden, fc_1, cls_num = 2, 32, 16, 5

    key = jax.random.PRNGKey(0)
    key, kp, kx = jax.random.split(key, 3)
    params = init_params(kp, in_, lstm_layers, hidden, fc_1, cls_num)
    x = jax.random.normal(kx, (batch, seq, in_), jnp.float32)

    out = jax.block_until_ready(
        easylstm_forward_jit(x, params, lstm_layers, hidden))

    ref = reference_forward(x, params, lstm_layers, hidden)
    # bf16 MXU operands (f32 accumulate, f32 cell state / nonlinearities) ->
    # loosened tolerance vs. the pure-f32 reference, per the perf review.
    np.testing.assert_allclose(np.asarray(out), np.asarray(ref), atol=2e-2, rtol=2e-2)

    print("KERNEL_OK")
</pallas_src>

<mosaic_0001>
module attributes {stable_mosaic.version = 11 : i64} {
  func.func @_easylstm_kernel(%arg0: memref<16x128xf32, #tpu.memory_space<vmem>>, %arg1: memref<32x128xbf16, #tpu.memory_space<vmem>>, %arg2: memref<32x128xbf16, #tpu.memory_space<vmem>>, %arg3: memref<32x128xbf16, #tpu.memory_space<vmem>>, %arg4: memref<1x128xf32, #tpu.memory_space<vmem>>, %arg5: memref<32x16xbf16, #tpu.memory_space<vmem>>, %arg6: memref<1x16xf32, #tpu.memory_space<vmem>>, %arg7: memref<16x5xbf16, #tpu.memory_space<vmem>>, %arg8: memref<1x5xf32, #tpu.memory_space<vmem>>, %arg9: memref<2x5xf32, #tpu.memory_space<vmem>>) attributes {dimension_semantics = [], scalar_prefetch = 0 : i64, scratch_operands = 0 : i64, tpu.core_type = #tpu.core_type<tc>} {
    %c0 = arith.constant 0 : index
    %c0_0 = arith.constant 0 : index
    %0 = vector.load %arg1[%c0, %c0_0] : memref<32x128xbf16, #tpu.memory_space<vmem>>, vector<32x128xbf16>
    %c0_1 = arith.constant 0 : index
    %c0_2 = arith.constant 0 : index
    %1 = vector.load %arg2[%c0_1, %c0_2] : memref<32x128xbf16, #tpu.memory_space<vmem>>, vector<32x128xbf16>
    %c0_3 = arith.constant 0 : index
    %c0_4 = arith.constant 0 : index
    %2 = vector.load %arg3[%c0_3, %c0_4] : memref<32x128xbf16, #tpu.memory_space<vmem>>, vector<32x128xbf16>
    %c0_5 = arith.constant 0 : index
    %c0_6 = arith.constant 0 : index
    %3 = vector.load %arg4[%c0_5, %c0_6] : memref<1x128xf32, #tpu.memory_space<vmem>>, vector<1x128xf32>
    %c0_7 = arith.constant 0 : index
    %c0_8 = arith.constant 0 : index
    %4 = vector.load %arg0[%c0_7, %c0_8] : memref<16x128xf32, #tpu.memory_space<vmem>>, vector<16x128xf32>
    %5 = tpu.iota {dimensions = array<i32: 1>} : vector<1x128xi32>
    %c64_i32 = arith.constant 64 : i32
    %6 = vector.broadcast %c64_i32 : i32 to vector<1x128xi32>
    %7 = arith.cmpi sge, %5, %6 : vector<1x128xi32>
    %c96_i32 = arith.constant 96 : i32
    %8 = vector.broadcast %c96_i32 : i32 to vector<1x128xi32>
    %9 = arith.cmpi slt, %5, %8 : vector<1x128xi32>
    %10 = arith.andi %7, %9 : vector<1x128xi1>
    %cst = arith.constant 2.000000e+00 : f32
    %cst_9 = arith.constant 1.000000e+00 : f32
    %11 = vector.broadcast %cst : f32 to vector<1x128xf32>
    %12 = vector.broadcast %cst_9 : f32 to vector<1x128xf32>
    %13 = arith.select %10, %11, %12 : vector<1x128xi1>, vector<1x128xf32>
    %cst_10 = arith.constant 0.000000e+00 : bf16
    %14 = vector.broadcast %cst_10 : bf16 to vector<2x32xbf16>
    %cst_11 = arith.constant 0.000000e+00 : bf16
    %15 = vector.broadcast %cst_11 : bf16 to vector<2x32xbf16>
    %cst_12 = arith.constant 0.000000e+00 : f32
    %16 = vector.broadcast %cst_12 : f32 to vector<2x32xf32>
    %cst_13 = arith.constant 0.000000e+00 : f32
    %17 = vector.broadcast %cst_13 : f32 to vector<2x32xf32>
    %18 = vector.extract_strided_slice %4 {offsets = [0, 0], sizes = [2, 128], strides = [1, 1]} : vector<16x128xf32> to vector<2x128xf32>
    %cst_14 = arith.constant dense<0.000000e+00> : vector<2x128xf32>
    %19 = tpu.matmul %14, %0, %cst_14 {dimension_numbers = #tpu.dot_dimension_numbers<[1], [0], [0], [1], [0, 0, 1, 1], [], []>} : vector<2x32xbf16>, vector<32x128xbf16>, vector<2x128xf32> -> vector<2x128xf32>
    %20 = arith.addf %18, %19 : vector<2x128xf32>
    %21 = vector.broadcast %13 : vector<1x128xf32> to vector<2x128xf32>
    %22 = arith.mulf %20, %21 : vector<2x128xf32>
    %23 = arith.negf %22 : vector<2x128xf32>
    %24 = math.exp %23 : vector<2x128xf32>
    %cst_15 = arith.constant 1.000000e+00 : f32
    %25 = vector.broadcast %cst_15 : f32 to vector<2x128xf32>
    %26 = arith.addf %25, %24 : vector<2x128xf32>
    %27 = arith.divf %25, %26 : vector<2x128xf32>
    %28 = vector.extract_strided_slice %27 {offsets = [0, 0], sizes = [2, 32], strides = [1, 1]} : vector<2x128xf32> to vector<2x32xf32>
    %29 = vector.extract_strided_slice %27 {offsets = [0, 32], sizes = [2, 32], strides = [1, 1]} : vector<2x128xf32> to vector<2x32xf32>
    %30 = vector.extract_strided_slice %27 {offsets = [0, 64], sizes = [2, 32], strides = [1, 1]} : vector<2x128xf32> to vector<2x32xf32>
    %cst_16 = arith.constant 2.000000e+00 : f32
    %31 = vector.broadcast %cst_16 : f32 to vector<2x32xf32>
    %32 = arith.mulf %31, %30 : vector<2x32xf32>
    %cst_17 = arith.constant 1.000000e+00 : f32
    %33 = vector.broadcast %cst_17 : f32 to vector<2x32xf32>
    %34 = arith.subf %32, %33 : vector<2x32xf32>
    %35 = vector.extract_strided_slice %27 {offsets = [0, 96], sizes = [2, 32], strides = [1, 1]} : vector<2x128xf32> to vector<2x32xf32>
    %36 = arith.mulf %29, %16 : vector<2x32xf32>
    %37 = arith.mulf %28, %34 : vector<2x32xf32>
    %38 = arith.addf %36, %37 : vector<2x32xf32>
    %39 = math.tanh %38 : vector<2x32xf32>
    %40 = arith.mulf %35, %39 : vector<2x32xf32>
    %41 = arith.truncf %40 : vector<2x32xf32> to vector<2x32xbf16>
    %cst_18 = arith.constant dense<0.000000e+00> : vector<2x128xf32>
    %42 = tpu.matmul %41, %1, %cst_18 {dimension_numbers = #tpu.dot_dimension_numbers<[1], [0], [0], [1], [0, 0, 1, 1], [], []>} : vector<2x32xbf16>, vector<32x128xbf16>, vector<2x128xf32> -> vector<2x128xf32>
    %cst_19 = arith.constant dense<0.000000e+00> : vector<2x128xf32>
    %43 = tpu.matmul %15, %2, %cst_19 {dimension_numbers = #tpu.dot_dimension_numbers<[1], [0], [0], [1], [0, 0, 1, 1], [], []>} : vector<2x32xbf16>, vector<32x128xbf16>, vector<2x128xf32> -> vector<2x128xf32>
    %44 = arith.addf %42, %43 : vector<2x128xf32>
    %45 = vector.broadcast %3 : vector<1x128xf32> to vector<2x128xf32>
    %46 = arith.addf %44, %45 : vector<2x128xf32>
    %47 = vector.broadcast %13 : vector<1x128xf32> to vector<2x128xf32>
    %48 = arith.mulf %46, %47 : vector<2x128xf32>
    %49 = arith.negf %48 : vector<2x128xf32>
    %50 = math.exp %49 : vector<2x128xf32>
    %cst_20 = arith.constant 1.000000e+00 : f32
    %51 = vector.broadcast %cst_20 : f32 to vector<2x128xf32>
    %52 = arith.addf %51, %50 : vector<2x128xf32>
    %53 = arith.divf %51, %52 : vector<2x128xf32>
    %54 = vector.extract_strided_slice %53 {offsets = [0, 0], sizes = [2, 32], strides = [1, 1]} : vector<2x128xf32> to vector<2x32xf32>
    %55 = vector.extract_strided_slice %53 {offsets = [0, 32], sizes = [2, 32], strides = [1, 1]} : vector<2x128xf32> to vector<2x32xf32>
    %56 = vector.extract_strided_slice %53 {offsets = [0, 64], sizes = [2, 32], strides = [1, 1]} : vector<2x128xf32> to vector<2x32xf32>
    %cst_21 = arith.constant 2.000000e+00 : f32
    %57 = vector.broadcast %cst_21 : f32 to vector<2x32xf32>
    %58 = arith.mulf %57, %56 : vector<2x32xf32>
    %cst_22 = arith.constant 1.000000e+00 : f32
    %59 = vector.broadcast %cst_22 : f32 to vector<2x32xf32>
    %60 = arith.subf %58, %59 : vector<2x32xf32>
    %61 = vector.extract_strided_slice %53 {offsets = [0, 96], sizes = [2, 32], strides = [1, 1]} : vector<2x128xf32> to vector<2x32xf32>
    %62 = arith.mulf %55, %17 : vector<2x32xf32>
    %63 = arith.mulf %54, %60 : vector<2x32xf32>
    %64 = arith.addf %62, %63 : vector<2x32xf32>
    %65 = math.tanh %64 : vector<2x32xf32>
    %66 = arith.mulf %61, %65 : vector<2x32xf32>
    %67 = arith.truncf %66 : vector<2x32xf32> to vector<2x32xbf16>
    %68 = vector.extract_strided_slice %4 {offsets = [2, 0], sizes = [2, 128], strides = [1, 1]} : vector<16x128xf32> to vector<2x128xf32>
    %cst_23 = arith.constant dense<0.000000e+00> : vector<2x128xf32>
    %69 = tpu.matmul %41, %0, %cst_23 {dimension_numbers = #tpu.dot_dimension_numbers<[1], [0], [0], [1], [0, 0, 1, 1], [], []>} : vector<2x32xbf16>, vector<32x128xbf16>, vector<2x128xf32> -> vector<2x128xf32>
    %70 = arith.addf %68, %69 : vector<2x128xf32>
    %71 = vector.broadcast %13 : vector<1x128xf32> to vector<2x128xf32>
    %72 = arith.mulf %70, %71 : vector<2x128xf32>
    %73 = arith.negf %72 : vector<2x128xf32>
    %74 = math.exp %73 : vector<2x128xf32>
    %cst_24 = arith.constant 1.000000e+00 : f32
    %75 = vector.broadcast %cst_24 : f32 to vector<2x128xf32>
    %76 = arith.addf %75, %74 : vector<2x128xf32>
    %77 = arith.divf %75, %76 : vector<2x128xf32>
    %78 = vector.extract_strided_slice %77 {offsets = [0, 0], sizes = [2, 32], strides = [1, 1]} : vector<2x128xf32> to vector<2x32xf32>
    %79 = vector.extract_strided_slice %77 {offsets = [0, 32], sizes = [2, 32], strides = [1, 1]} : vector<2x128xf32> to vector<2x32xf32>
    %80 = vector.extract_strided_slice %77 {offsets = [0, 64], sizes = [2, 32], strides = [1, 1]} : vector<2x128xf32> to vector<2x32xf32>
    %cst_25 = arith.constant 2.000000e+00 : f32
    %81 = vector.broadcast %cst_25 : f32 to vector<2x32xf32>
    %82 = arith.mulf %81, %80 : vector<2x32xf32>
    %cst_26 = arith.constant 1.000000e+00 : f32
    %83 = vector.broadcast %cst_26 : f32 to vector<2x32xf32>
    %84 = arith.subf %82, %83 : vector<2x32xf32>
    %85 = vector.extract_strided_slice %77 {offsets = [0, 96], sizes = [2, 32], strides = [1, 1]} : vector<2x128xf32> to vector<2x32xf32>
    %86 = arith.mulf %79, %38 : vector<2x32xf32>
    %87 = arith.mulf %78, %84 : vector<2x32xf32>
    %88 = arith.addf %86, %87 : vector<2x32xf32>
    %89 = math.tanh %88 : vector<2x32xf32>
    %90 = arith.mulf %85, %89 : vector<2x32xf32>
    %91 = arith.truncf %90 : vector<2x32xf32> to vector<2x32xbf16>
    %cst_27 = arith.constant dense<0.000000e+00> : vector<2x128xf32>
    %92 = tpu.matmul %91, %1, %cst_27 {dimension_numbers = #tpu.dot_dimension_numbers<[1], [0], [0], [1], [0, 0, 1, 1], [], []>} : vector<2x32xbf16>, vector<32x128xbf16>, vector<2x128xf32> -> vector<2x128xf32>
    %cst_28 = arith.constant dense<0.000000e+00> : vector<2x128xf32>
    %93 = tpu.matmul %67, %2, %cst_28 {dimension_numbers = #tpu.dot_dimension_numbers<[1], [0], [0], [1], [0, 0, 1, 1], [], []>} : vector<2x32xbf16>, vector<32x128xbf16>, vector<2x128xf32> -> vector<2x128xf32>
    %94 = arith.addf %92, %93 : vector<2x128xf32>
    %95 = vector.broadcast %3 : vector<1x128xf32> to vector<2x128xf32>
    %96 = arith.addf %94, %95 : vector<2x128xf32>
    %97 = vector.broadcast %13 : vector<1x128xf32> to vector<2x128xf32>
    %98 = arith.mulf %96, %97 : vector<2x128xf32>
    %99 = arith.negf %98 : vector<2x128xf32>
    %100 = math.exp %99 : vector<2x128xf32>
    %cst_29 = arith.constant 1.000000e+00 : f32
    %101 = vector.broadcast %cst_29 : f32 to vector<2x128xf32>
    %102 = arith.addf %101, %100 : vector<2x128xf32>
    %103 = arith.divf %101, %102 : vector<2x128xf32>
    %104 = vector.extract_strided_slice %103 {offsets = [0, 0], sizes = [2, 32], strides = [1, 1]} : vector<2x128xf32> to vector<2x32xf32>
    %105 = vector.extract_strided_slice %103 {offsets = [0, 32], sizes = [2, 32], strides = [1, 1]} : vector<2x128xf32> to vector<2x32xf32>
    %106 = vector.extract_strided_slice %103 {offsets = [0, 64], sizes = [2, 32], strides = [1, 1]} : vector<2x128xf32> to vector<2x32xf32>
    %cst_30 = arith.constant 2.000000e+00 : f32
    %107 = vector.broadcast %cst_30 : f32 to vector<2x32xf32>
    %108 = arith.mulf %107, %106 : vector<2x32xf32>
    %cst_31 = arith.constant 1.000000e+00 : f32
    %109 = vector.broadcast %cst_31 : f32 to vector<2x32xf32>
    %110 = arith.subf %108, %109 : vector<2x32xf32>
    %111 = vector.extract_strided_slice %103 {offsets = [0, 96], sizes = [2, 32], strides = [1, 1]} : vector<2x128xf32> to vector<2x32xf32>
    %112 = arith.mulf %105, %64 : vector<2x32xf32>
    %113 = arith.mulf %104, %110 : vector<2x32xf32>
    %114 = arith.addf %112, %113 : vector<2x32xf32>
    %115 = math.tanh %114 : vector<2x32xf32>
    %116 = arith.mulf %111, %115 : vector<2x32xf32>
    %117 = arith.truncf %116 : vector<2x32xf32> to vector<2x32xbf16>
    %118 = vector.extract_strided_slice %4 {offsets = [4, 0], sizes = [2, 128], strides = [1, 1]} : vector<16x128xf32> to vector<2x128xf32>
    %cst_32 = arith.constant dense<0.000000e+00> : vector<2x128xf32>
    %119 = tpu.matmul %91, %0, %cst_32 {dimension_numbers = #tpu.dot_dimension_numbers<[1], [0], [0], [1], [0, 0, 1, 1], [], []>} : vector<2x32xbf16>, vector<32x128xbf16>, vector<2x128xf32> -> vector<2x128xf32>
    %120 = arith.addf %118, %119 : vector<2x128xf32>
    %121 = vector.broadcast %13 : vector<1x128xf32> to vector<2x128xf32>
    %122 = arith.mulf %120, %121 : vector<2x128xf32>
    %123 = arith.negf %122 : vector<2x128xf32>
    %124 = math.exp %123 : vector<2x128xf32>
    %cst_33 = arith.constant 1.000000e+00 : f32
    %125 = vector.broadcast %cst_33 : f32 to vector<2x128xf32>
    %126 = arith.addf %125, %124 : vector<2x128xf32>
    %127 = arith.divf %125, %126 : vector<2x128xf32>
    %128 = vector.extract_strided_slice %127 {offsets = [0, 0], sizes = [2, 32], strides = [1, 1]} : vector<2x128xf32> to vector<2x32xf32>
    %129 = vector.extract_strided_slice %127 {offsets = [0, 32], sizes = [2, 32], strides = [1, 1]} : vector<2x128xf32> to vector<2x32xf32>
    %130 = vector.extract_strided_slice %127 {offsets = [0, 64], sizes = [2, 32], strides = [1, 1]} : vector<2x128xf32> to vector<2x32xf32>
    %cst_34 = arith.constant 2.000000e+00 : f32
    %131 = vector.broadcast %cst_34 : f32 to vector<2x32xf32>
    %132 = arith.mulf %131, %130 : vector<2x32xf32>
    %cst_35 = arith.constant 1.000000e+00 : f32
    %133 = vector.broadcast %cst_35 : f32 to vector<2x32xf32>
    %134 = arith.subf %132, %133 : vector<2x32xf32>
    %135 = vector.extract_strided_slice %127 {offsets = [0, 96], sizes = [2, 32], strides = [1, 1]} : vector<2x128xf32> to vector<2x32xf32>
    %136 = arith.mulf %129, %88 : vector<2x32xf32>
    %137 = arith.mulf %128, %134 : vector<2x32xf32>
    %138 = arith.addf %136, %137 : vector<2x32xf32>
    %139 = math.tanh %138 : vector<2x32xf32>
    %140 = arith.mulf %135, %139 : vector<2x32xf32>
    %141 = arith.truncf %140 : vector<2x32xf32> to vector<2x32xbf16>
    %cst_36 = arith.constant dense<0.000000e+00> : vector<2x128xf32>
    %142 = tpu.matmul %141, %1, %cst_36 {dimension_numbers = #tpu.dot_dimension_numbers<[1], [0], [0], [1], [0, 0, 1, 1], [], []>} : vector<2x32xbf16>, vector<32x128xbf16>, vector<2x128xf32> -> vector<2x128xf32>
    %cst_37 = arith.constant dense<0.000000e+00> : vector<2x128xf32>
    %143 = tpu.matmul %117, %2, %cst_37 {dimension_numbers = #tpu.dot_dimension_numbers<[1], [0], [0], [1], [0, 0, 1, 1], [], []>} : vector<2x32xbf16>, vector<32x128xbf16>, vector<2x128xf32> -> vector<2x128xf32>
    %144 = arith.addf %142, %143 : vector<2x128xf32>
    %145 = vector.broadcast %3 : vector<1x128xf32> to vector<2x128xf32>
    %146 = arith.addf %144, %145 : vector<2x128xf32>
    %147 = vector.broadcast %13 : vector<1x128xf32> to vector<2x128xf32>
    %148 = arith.mulf %146, %147 : vector<2x128xf32>
    %149 = arith.negf %148 : vector<2x128xf32>
    %150 = math.exp %149 : vector<2x128xf32>
    %cst_38 = arith.constant 1.000000e+00 : f32
    %151 = vector.broadcast %cst_38 : f32 to vector<2x128xf32>
    %152 = arith.addf %151, %150 : vector<2x128xf32>
    %153 = arith.divf %151, %152 : vector<2x128xf32>
    %154 = vector.extract_strided_slice %153 {offsets = [0, 0], sizes = [2, 32], strides = [1, 1]} : vector<2x128xf32> to vector<2x32xf32>
    %155 = vector.extract_strided_slice %153 {offsets = [0, 32], sizes = [2, 32], strides = [1, 1]} : vector<2x128xf32> to vector<2x32xf32>
    %156 = vector.extract_strided_slice %153 {offsets = [0, 64], sizes = [2, 32], strides = [1, 1]} : vector<2x128xf32> to vector<2x32xf32>
    %cst_39 = arith.constant 2.000000e+00 : f32
    %157 = vector.broadcast %cst_39 : f32 to vector<2x32xf32>
    %158 = arith.mulf %157, %156 : vector<2x32xf32>
    %cst_40 = arith.constant 1.000000e+00 : f32
    %159 = vector.broadcast %cst_40 : f32 to vector<2x32xf32>
    %160 = arith.subf %158, %159 : vector<2x32xf32>
    %161 = vector.extract_strided_slice %153 {offsets = [0, 96], sizes = [2, 32], strides = [1, 1]} : vector<2x128xf32> to vector<2x32xf32>
    %162 = arith.mulf %155, %114 : vector<2x32xf32>
    %163 = arith.mulf %154, %160 : vector<2x32xf32>
    %164 = arith.addf %162, %163 : vector<2x32xf32>
    %165 = math.tanh %164 : vector<2x32xf32>
    %166 = arith.mulf %161, %165 : vector<2x32xf32>
    %167 = arith.truncf %166 : vector<2x32xf32> to vector<2x32xbf16>
    %168 = vector.extract_strided_slice %4 {offsets = [6, 0], sizes = [2, 128], strides = [1, 1]} : vector<16x128xf32> to vector<2x128xf32>
    %cst_41 = arith.constant dense<0.000000e+00> : vector<2x128xf32>
    %169 = tpu.matmul %141, %0, %cst_41 {dimension_numbers = #tpu.dot_dimension_numbers<[1], [0], [0], [1], [0, 0, 1, 1], [], []>} : vector<2x32xbf16>, vector<32x128xbf16>, vector<2x128xf32> -> vector<2x128xf32>
    %170 = arith.addf %168, %169 : vector<2x128xf32>
    %171 = vector.broadcast %13 : vector<1x128xf32> to vector<2x128xf32>
    %172 = arith.mulf %170, %171 : vector<2x128xf32>
    %173 = arith.negf %172 : vector<2x128xf32>
    %174 = math.exp %173 : vector<2x128xf32>
    %cst_42 = arith.constant 1.000000e+00 : f32
    %175 = vector.broadcast %cst_42 : f32 to vector<2x128xf32>
    %176 = arith.addf %175, %174 : vector<2x128xf32>
    %177 = arith.divf %175, %176 : vector<2x128xf32>
    %178 = vector.extract_strided_slice %177 {offsets = [0, 0], sizes = [2, 32], strides = [1, 1]} : vector<2x128xf32> to vector<2x32xf32>
    %179 = vector.extract_strided_slice %177 {offsets = [0, 32], sizes = [2, 32], strides = [1, 1]} : vector<2x128xf32> to vector<2x32xf32>
    %180 = vector.extract_strided_slice %177 {offsets = [0, 64], sizes = [2, 32], strides = [1, 1]} : vector<2x128xf32> to vector<2x32xf32>
    %cst_43 = arith.constant 2.000000e+00 : f32
    %181 = vector.broadcast %cst_43 : f32 to vector<2x32xf32>
    %182 = arith.mulf %181, %180 : vector<2x32xf32>
    %cst_44 = arith.constant 1.000000e+00 : f32
    %183 = vector.broadcast %cst_44 : f32 to vector<2x32xf32>
    %184 = arith.subf %182, %183 : vector<2x32xf32>
    %185 = vector.extract_strided_slice %177 {offsets = [0, 96], sizes = [2, 32], strides = [1, 1]} : vector<2x128xf32> to vector<2x32xf32>
    %186 = arith.mulf %179, %138 : vector<2x32xf32>
    %187 = arith.mulf %178, %184 : vector<2x32xf32>
    %188 = arith.addf %186, %187 : vector<2x32xf32>
    %189 = math.tanh %188 : vector<2x32xf32>
    %190 = arith.mulf %185, %189 : vector<2x32xf32>
    %191 = arith.truncf %190 : vector<2x32xf32> to vector<2x32xbf16>
    %cst_45 = arith.constant dense<0.000000e+00> : vector<2x128xf32>
    %192 = tpu.matmul %191, %1, %cst_45 {dimension_numbers = #tpu.dot_dimension_numbers<[1], [0], [0], [1], [0, 0, 1, 1], [], []>} : vector<2x32xbf16>, vector<32x128xbf16>, vector<2x128xf32> -> vector<2x128xf32>
    %cst_46 = arith.constant dense<0.000000e+00> : vector<2x128xf32>
    %193 = tpu.matmul %167, %2, %cst_46 {dimension_numbers = #tpu.dot_dimension_numbers<[1], [0], [0], [1], [0, 0, 1, 1], [], []>} : vector<2x32xbf16>, vector<32x128xbf16>, vector<2x128xf32> -> vector<2x128xf32>
    %194 = arith.addf %192, %193 : vector<2x128xf32>
    %195 = vector.broadcast %3 : vector<1x128xf32> to vector<2x128xf32>
    %196 = arith.addf %194, %195 : vector<2x128xf32>
    %197 = vector.broadcast %13 : vector<1x128xf32> to vector<2x128xf32>
    %198 = arith.mulf %196, %197 : vector<2x128xf32>
    %199 = arith.negf %198 : vector<2x128xf32>
    %200 = math.exp %199 : vector<2x128xf32>
    %cst_47 = arith.constant 1.000000e+00 : f32
    %201 = vector.broadcast %cst_47 : f32 to vector<2x128xf32>
    %202 = arith.addf %201, %200 : vector<2x128xf32>
    %203 = arith.divf %201, %202 : vector<2x128xf32>
    %204 = vector.extract_strided_slice %203 {offsets = [0, 0], sizes = [2, 32], strides = [1, 1]} : vector<2x128xf32> to vector<2x32xf32>
    %205 = vector.extract_strided_slice %203 {offsets = [0, 32], sizes = [2, 32], strides = [1, 1]} : vector<2x128xf32> to vector<2x32xf32>
    %206 = vector.extract_strided_slice %203 {offsets = [0, 64], sizes = [2, 32], strides = [1, 1]} : vector<2x128xf32> to vector<2x32xf32>
    %cst_48 = arith.constant 2.000000e+00 : f32
    %207 = vector.broadcast %cst_48 : f32 to vector<2x32xf32>
    %208 = arith.mulf %207, %206 : vector<2x32xf32>
    %cst_49 = arith.constant 1.000000e+00 : f32
    %209 = vector.broadcast %cst_49 : f32 to vector<2x32xf32>
    %210 = arith.subf %208, %209 : vector<2x32xf32>
    %211 = vector.extract_strided_slice %203 {offsets = [0, 96], sizes = [2, 32], strides = [1, 1]} : vector<2x128xf32> to vector<2x32xf32>
    %212 = arith.mulf %205, %164 : vector<2x32xf32>
    %213 = arith.mulf %204, %210 : vector<2x32xf32>
    %214 = arith.addf %212, %213 : vector<2x32xf32>
    %215 = math.tanh %214 : vector<2x32xf32>
    %216 = arith.mulf %211, %215 : vector<2x32xf32>
    %217 = arith.truncf %216 : vector<2x32xf32> to vector<2x32xbf16>
    %218 = vector.extract_strided_slice %4 {offsets = [8, 0], sizes = [2, 128], strides = [1, 1]} : vector<16x128xf32> to vector<2x128xf32>
    %cst_50 = arith.constant dense<0.000000e+00> : vector<2x128xf32>
    %219 = tpu.matmul %191, %0, %cst_50 {dimension_numbers = #tpu.dot_dimension_numbers<[1], [0], [0], [1], [0, 0, 1, 1], [], []>} : vector<2x32xbf16>, vector<32x128xbf16>, vector<2x128xf32> -> vector<2x128xf32>
    %220 = arith.addf %218, %219 : vector<2x128xf32>
    %221 = vector.broadcast %13 : vector<1x128xf32> to vector<2x128xf32>
    %222 = arith.mulf %220, %221 : vector<2x128xf32>
    %223 = arith.negf %222 : vector<2x128xf32>
    %224 = math.exp %223 : vector<2x128xf32>
    %cst_51 = arith.constant 1.000000e+00 : f32
    %225 = vector.broadcast %cst_51 : f32 to vector<2x128xf32>
    %226 = arith.addf %225, %224 : vector<2x128xf32>
    %227 = arith.divf %225, %226 : vector<2x128xf32>
    %228 = vector.extract_strided_slice %227 {offsets = [0, 0], sizes = [2, 32], strides = [1, 1]} : vector<2x128xf32> to vector<2x32xf32>
    %229 = vector.extract_strided_slice %227 {offsets = [0, 32], sizes = [2, 32], strides = [1, 1]} : vector<2x128xf32> to vector<2x32xf32>
    %230 = vector.extract_strided_slice %227 {offsets = [0, 64], sizes = [2, 32], strides = [1, 1]} : vector<2x128xf32> to vector<2x32xf32>
    %cst_52 = arith.constant 2.000000e+00 : f32
    %231 = vector.broadcast %cst_52 : f32 to vector<2x32xf32>
    %232 = arith.mulf %231, %230 : vector<2x32xf32>
    %cst_53 = arith.constant 1.000000e+00 : f32
    %233 = vector.broadcast %cst_53 : f32 to vector<2x32xf32>
    %234 = arith.subf %232, %233 : vector<2x32xf32>
    %235 = vector.extract_strided_slice %227 {offsets = [0, 96], sizes = [2, 32], strides = [1, 1]} : vector<2x128xf32> to vector<2x32xf32>
    %236 = arith.mulf %229, %188 : vector<2x32xf32>
    %237 = arith.mulf %228, %234 : vector<2x32xf32>
    %238 = arith.addf %236, %237 : vector<2x32xf32>
    %239 = math.tanh %238 : vector<2x32xf32>
    %240 = arith.mulf %235, %239 : vector<2x32xf32>
    %241 = arith.truncf %240 : vector<2x32xf32> to vector<2x32xbf16>
    %cst_54 = arith.constant dense<0.000000e+00> : vector<2x128xf32>
    %242 = tpu.matmul %241, %1, %cst_54 {dimension_numbers = #tpu.dot_dimension_numbers<[1], [0], [0], [1], [0, 0, 1, 1], [], []>} : vector<2x32xbf16>, vector<32x128xbf16>, vector<2x128xf32> -> vector<2x128xf32>
    %cst_55 = arith.constant dense<0.000000e+00> : vector<2x128xf32>
    %243 = tpu.matmul %217, %2, %cst_55 {dimension_numbers = #tpu.dot_dimension_numbers<[1], [0], [0], [1], [0, 0, 1, 1], [], []>} : vector<2x32xbf16>, vector<32x128xbf16>, vector<2x128xf32> -> vector<2x128xf32>
    %244 = arith.addf %242, %243 : vector<2x128xf32>
    %245 = vector.broadcast %3 : vector<1x128xf32> to vector<2x128xf32>
    %246 = arith.addf %244, %245 : vector<2x128xf32>
    %247 = vector.broadcast %13 : vector<1x128xf32> to vector<2x128xf32>
    %248 = arith.mulf %246, %247 : vector<2x128xf32>
    %249 = arith.negf %248 : vector<2x128xf32>
    %250 = math.exp %249 : vector<2x128xf32>
    %cst_56 = arith.constant 1.000000e+00 : f32
    %251 = vector.broadcast %cst_56 : f32 to vector<2x128xf32>
    %252 = arith.addf %251, %250 : vector<2x128xf32>
    %253 = arith.divf %251, %252 : vector<2x128xf32>
    %254 = vector.extract_strided_slice %253 {offsets = [0, 0], sizes = [2, 32], strides = [1, 1]} : vector<2x128xf32> to vector<2x32xf32>
    %255 = vector.extract_strided_slice %253 {offsets = [0, 32], sizes = [2, 32], strides = [1, 1]} : vector<2x128xf32> to vector<2x32xf32>
    %256 = vector.extract_strided_slice %253 {offsets = [0, 64], sizes = [2, 32], strides = [1, 1]} : vector<2x128xf32> to vector<2x32xf32>
    %cst_57 = arith.constant 2.000000e+00 : f32
    %257 = vector.broadcast %cst_57 : f32 to vector<2x32xf32>
    %258 = arith.mulf %257, %256 : vector<2x32xf32>
    %cst_58 = arith.constant 1.000000e+00 : f32
    %259 = vector.broadcast %cst_58 : f32 to vector<2x32xf32>
    %260 = arith.subf %258, %259 : vector<2x32xf32>
    %261 = vector.extract_strided_slice %253 {offsets = [0, 96], sizes = [2, 32], strides = [1, 1]} : vector<2x128xf32> to vector<2x32xf32>
    %262 = arith.mulf %255, %214 : vector<2x32xf32>
    %263 = arith.mulf %254, %260 : vector<2x32xf32>
    %264 = arith.addf %262, %263 : vector<2x32xf32>
    %265 = math.tanh %264 : vector<2x32xf32>
    %266 = arith.mulf %261, %265 : vector<2x32xf32>
    %267 = arith.truncf %266 : vector<2x32xf32> to vector<2x32xbf16>
    %268 = vector.extract_strided_slice %4 {offsets = [10, 0], sizes = [2, 128], strides = [1, 1]} : vector<16x128xf32> to vector<2x128xf32>
    %cst_59 = arith.constant dense<0.000000e+00> : vector<2x128xf32>
    %269 = tpu.matmul %241, %0, %cst_59 {dimension_numbers = #tpu.dot_dimension_numbers<[1], [0], [0], [1], [0, 0, 1, 1], [], []>} : vector<2x32xbf16>, vector<32x128xbf16>, vector<2x128xf32> -> vector<2x128xf32>
    %270 = arith.addf %268, %269 : vector<2x128xf32>
    %271 = vector.broadcast %13 : vector<1x128xf32> to vector<2x128xf32>
    %272 = arith.mulf %270, %271 : vector<2x128xf32>
    %273 = arith.negf %272 : vector<2x128xf32>
    %274 = math.exp %273 : vector<2x128xf32>
    %cst_60 = arith.constant 1.000000e+00 : f32
    %275 = vector.broadcast %cst_60 : f32 to vector<2x128xf32>
    %276 = arith.addf %275, %274 : vector<2x128xf32>
    %277 = arith.divf %275, %276 : vector<2x128xf32>
    %278 = vector.extract_strided_slice %277 {offsets = [0, 0], sizes = [2, 32], strides = [1, 1]} : vector<2x128xf32> to vector<2x32xf32>
    %279 = vector.extract_strided_slice %277 {offsets = [0, 32], sizes = [2, 32], strides = [1, 1]} : vector<2x128xf32> to vector<2x32xf32>
    %280 = vector.extract_strided_slice %277 {offsets = [0, 64], sizes = [2, 32], strides = [1, 1]} : vector<2x128xf32> to vector<2x32xf32>
    %cst_61 = arith.constant 2.000000e+00 : f32
    %281 = vector.broadcast %cst_61 : f32 to vector<2x32xf32>
    %282 = arith.mulf %281, %280 : vector<2x32xf32>
    %cst_62 = arith.constant 1.000000e+00 : f32
    %283 = vector.broadcast %cst_62 : f32 to vector<2x32xf32>
    %284 = arith.subf %282, %283 : vector<2x32xf32>
    %285 = vector.extract_strided_slice %277 {offsets = [0, 96], sizes = [2, 32], strides = [1, 1]} : vector<2x128xf32> to vector<2x32xf32>
    %286 = arith.mulf %279, %238 : vector<2x32xf32>
    %287 = arith.mulf %278, %284 : vector<2x32xf32>
    %288 = arith.addf %286, %287 : vector<2x32xf32>
    %289 = math.tanh %288 : vector<2x32xf32>
    %290 = arith.mulf %285, %289 : vector<2x32xf32>
    %291 = arith.truncf %290 : vector<2x32xf32> to vector<2x32xbf16>
    %cst_63 = arith.constant dense<0.000000e+00> : vector<2x128xf32>
    %292 = tpu.matmul %291, %1, %cst_63 {dimension_numbers = #tpu.dot_dimension_numbers<[1], [0], [0], [1], [0, 0, 1, 1], [], []>} : vector<2x32xbf16>, vector<32x128xbf16>, vector<2x128xf32> -> vector<2x128xf32>
    %cst_64 = arith.constant dense<0.000000e+00> : vector<2x128xf32>
    %293 = tpu.matmul %267, %2, %cst_64 {dimension_numbers = #tpu.dot_dimension_numbers<[1], [0], [0], [1], [0, 0, 1, 1], [], []>} : vector<2x32xbf16>, vector<32x128xbf16>, vector<2x128xf32> -> vector<2x128xf32>
    %294 = arith.addf %292, %293 : vector<2x128xf32>
    %295 = vector.broadcast %3 : vector<1x128xf32> to vector<2x128xf32>
    %296 = arith.addf %294, %295 : vector<2x128xf32>
    %297 = vector.broadcast %13 : vector<1x128xf32> to vector<2x128xf32>
    %298 = arith.mulf %296, %297 : vector<2x128xf32>
    %299 = arith.negf %298 : vector<2x128xf32>
    %300 = math.exp %299 : vector<2x128xf32>
    %cst_65 = arith.constant 1.000000e+00 : f32
    %301 = vector.broadcast %cst_65 : f32 to vector<2x128xf32>
    %302 = arith.addf %301, %300 : vector<2x128xf32>
    %303 = arith.divf %301, %302 : vector<2x128xf32>
    %304 = vector.extract_strided_slice %303 {offsets = [0, 0], sizes = [2, 32], strides = [1, 1]} : vector<2x128xf32> to vector<2x32xf32>
    %305 = vector.extract_strided_slice %303 {offsets = [0, 32], sizes = [2, 32], strides = [1, 1]} : vector<2x128xf32> to vector<2x32xf32>
    %306 = vector.extract_strided_slice %303 {offsets = [0, 64], sizes = [2, 32], strides = [1, 1]} : vector<2x128xf32> to vector<2x32xf32>
    %cst_66 = arith.constant 2.000000e+00 : f32
    %307 = vector.broadcast %cst_66 : f32 to vector<2x32xf32>
    %308 = arith.mulf %307, %306 : vector<2x32xf32>
    %cst_67 = arith.constant 1.000000e+00 : f32
    %309 = vector.broadcast %cst_67 : f32 to vector<2x32xf32>
    %310 = arith.subf %308, %309 : vector<2x32xf32>
    %311 = vector.extract_strided_slice %303 {offsets = [0, 96], sizes = [2, 32], strides = [1, 1]} : vector<2x128xf32> to vector<2x32xf32>
    %312 = arith.mulf %305, %264 : vector<2x32xf32>
    %313 = arith.mulf %304, %310 : vector<2x32xf32>
    %314 = arith.addf %312, %313 : vector<2x32xf32>
    %315 = math.tanh %314 : vector<2x32xf32>
    %316 = arith.mulf %311, %315 : vector<2x32xf32>
    %317 = arith.truncf %316 : vector<2x32xf32> to vector<2x32xbf16>
    %318 = vector.extract_strided_slice %4 {offsets = [12, 0], sizes = [2, 128], strides = [1, 1]} : vector<16x128xf32> to vector<2x128xf32>
    %cst_68 = arith.constant dense<0.000000e+00> : vector<2x128xf32>
    %319 = tpu.matmul %291, %0, %cst_68 {dimension_numbers = #tpu.dot_dimension_numbers<[1], [0], [0], [1], [0, 0, 1, 1], [], []>} : vector<2x32xbf16>, vector<32x128xbf16>, vector<2x128xf32> -> vector<2x128xf32>
    %320 = arith.addf %318, %319 : vector<2x128xf32>
    %321 = vector.broadcast %13 : vector<1x128xf32> to vector<2x128xf32>
    %322 = arith.mulf %320, %321 : vector<2x128xf32>
    %323 = arith.negf %322 : vector<2x128xf32>
    %324 = math.exp %323 : vector<2x128xf32>
    %cst_69 = arith.constant 1.000000e+00 : f32
    %325 = vector.broadcast %cst_69 : f32 to vector<2x128xf32>
    %326 = arith.addf %325, %324 : vector<2x128xf32>
    %327 = arith.divf %325, %326 : vector<2x128xf32>
    %328 = vector.extract_strided_slice %327 {offsets = [0, 0], sizes = [2, 32], strides = [1, 1]} : vector<2x128xf32> to vector<2x32xf32>
    %329 = vector.extract_strided_slice %327 {offsets = [0, 32], sizes = [2, 32], strides = [1, 1]} : vector<2x128xf32> to vector<2x32xf32>
    %330 = vector.extract_strided_slice %327 {offsets = [0, 64], sizes = [2, 32], strides = [1, 1]} : vector<2x128xf32> to vector<2x32xf32>
    %cst_70 = arith.constant 2.000000e+00 : f32
    %331 = vector.broadcast %cst_70 : f32 to vector<2x32xf32>
    %332 = arith.mulf %331, %330 : vector<2x32xf32>
    %cst_71 = arith.constant 1.000000e+00 : f32
    %333 = vector.broadcast %cst_71 : f32 to vector<2x32xf32>
    %334 = arith.subf %332, %333 : vector<2x32xf32>
    %335 = vector.extract_strided_slice %327 {offsets = [0, 96], sizes = [2, 32], strides = [1, 1]} : vector<2x128xf32> to vector<2x32xf32>
    %336 = arith.mulf %329, %288 : vector<2x32xf32>
    %337 = arith.mulf %328, %334 : vector<2x32xf32>
    %338 = arith.addf %336, %337 : vector<2x32xf32>
    %339 = math.tanh %338 : vector<2x32xf32>
    %340 = arith.mulf %335, %339 : vector<2x32xf32>
    %341 = arith.truncf %340 : vector<2x32xf32> to vector<2x32xbf16>
    %cst_72 = arith.constant dense<0.000000e+00> : vector<2x128xf32>
    %342 = tpu.matmul %341, %1, %cst_72 {dimension_numbers = #tpu.dot_dimension_numbers<[1], [0], [0], [1], [0, 0, 1, 1], [], []>} : vector<2x32xbf16>, vector<32x128xbf16>, vector<2x128xf32> -> vector<2x128xf32>
    %cst_73 = arith.constant dense<0.000000e+00> : vector<2x128xf32>
    %343 = tpu.matmul %317, %2, %cst_73 {dimension_numbers = #tpu.dot_dimension_numbers<[1], [0], [0], [1], [0, 0, 1, 1], [], []>} : vector<2x32xbf16>, vector<32x128xbf16>, vector<2x128xf32> -> vector<2x128xf32>
    %344 = arith.addf %342, %343 : vector<2x128xf32>
    %345 = vector.broadcast %3 : vector<1x128xf32> to vector<2x128xf32>
    %346 = arith.addf %344, %345 : vector<2x128xf32>
    %347 = vector.broadcast %13 : vector<1x128xf32> to vector<2x128xf32>
    %348 = arith.mulf %346, %347 : vector<2x128xf32>
    %349 = arith.negf %348 : vector<2x128xf32>
    %350 = math.exp %349 : vector<2x128xf32>
    %cst_74 = arith.constant 1.000000e+00 : f32
    %351 = vector.broadcast %cst_74 : f32 to vector<2x128xf32>
    %352 = arith.addf %351, %350 : vector<2x128xf32>
    %353 = arith.divf %351, %352 : vector<2x128xf32>
    %354 = vector.extract_strided_slice %353 {offsets = [0, 0], sizes = [2, 32], strides = [1, 1]} : vector<2x128xf32> to vector<2x32xf32>
    %355 = vector.extract_strided_slice %353 {offsets = [0, 32], sizes = [2, 32], strides = [1, 1]} : vector<2x128xf32> to vector<2x32xf32>
    %356 = vector.extract_strided_slice %353 {offsets = [0, 64], sizes = [2, 32], strides = [1, 1]} : vector<2x128xf32> to vector<2x32xf32>
    %cst_75 = arith.constant 2.000000e+00 : f32
    %357 = vector.broadcast %cst_75 : f32 to vector<2x32xf32>
    %358 = arith.mulf %357, %356 : vector<2x32xf32>
    %cst_76 = arith.constant 1.000000e+00 : f32
    %359 = vector.broadcast %cst_76 : f32 to vector<2x32xf32>
    %360 = arith.subf %358, %359 : vector<2x32xf32>
    %361 = vector.extract_strided_slice %353 {offsets = [0, 96], sizes = [2, 32], strides = [1, 1]} : vector<2x128xf32> to vector<2x32xf32>
    %362 = arith.mulf %355, %314 : vector<2x32xf32>
    %363 = arith.mulf %354, %360 : vector<2x32xf32>
    %364 = arith.addf %362, %363 : vector<2x32xf32>
    %365 = math.tanh %364 : vector<2x32xf32>
    %366 = arith.mulf %361, %365 : vector<2x32xf32>
    %367 = arith.truncf %366 : vector<2x32xf32> to vector<2x32xbf16>
    %368 = vector.extract_strided_slice %4 {offsets = [14, 0], sizes = [2, 128], strides = [1, 1]} : vector<16x128xf32> to vector<2x128xf32>
    %cst_77 = arith.constant dense<0.000000e+00> : vector<2x128xf32>
    %369 = tpu.matmul %341, %0, %cst_77 {dimension_numbers = #tpu.dot_dimension_numbers<[1], [0], [0], [1], [0, 0, 1, 1], [], []>} : vector<2x32xbf16>, vector<32x128xbf16>, vector<2x128xf32> -> vector<2x128xf32>
    %370 = arith.addf %368, %369 : vector<2x128xf32>
    %371 = vector.broadcast %13 : vector<1x128xf32> to vector<2x128xf32>
    %372 = arith.mulf %370, %371 : vector<2x128xf32>
    %373 = arith.negf %372 : vector<2x128xf32>
    %374 = math.exp %373 : vector<2x128xf32>
    %cst_78 = arith.constant 1.000000e+00 : f32
    %375 = vector.broadcast %cst_78 : f32 to vector<2x128xf32>
    %376 = arith.addf %375, %374 : vector<2x128xf32>
    %377 = arith.divf %375, %376 : vector<2x128xf32>
    %378 = vector.extract_strided_slice %377 {offsets = [0, 0], sizes = [2, 32], strides = [1, 1]} : vector<2x128xf32> to vector<2x32xf32>
    %379 = vector.extract_strided_slice %377 {offsets = [0, 32], sizes = [2, 32], strides = [1, 1]} : vector<2x128xf32> to vector<2x32xf32>
    %380 = vector.extract_strided_slice %377 {offsets = [0, 64], sizes = [2, 32], strides = [1, 1]} : vector<2x128xf32> to vector<2x32xf32>
    %cst_79 = arith.constant 2.000000e+00 : f32
    %381 = vector.broadcast %cst_79 : f32 to vector<2x32xf32>
    %382 = arith.mulf %381, %380 : vector<2x32xf32>
    %cst_80 = arith.constant 1.000000e+00 : f32
    %383 = vector.broadcast %cst_80 : f32 to vector<2x32xf32>
    %384 = arith.subf %382, %383 : vector<2x32xf32>
    %385 = vector.extract_strided_slice %377 {offsets = [0, 96], sizes = [2, 32], strides = [1, 1]} : vector<2x128xf32> to vector<2x32xf32>
    %386 = arith.mulf %379, %338 : vector<2x32xf32>
    %387 = arith.mulf %378, %384 : vector<2x32xf32>
    %388 = arith.addf %386, %387 : vector<2x32xf32>
    %389 = math.tanh %388 : vector<2x32xf32>
    %390 = arith.mulf %385, %389 : vector<2x32xf32>
    %391 = arith.truncf %390 : vector<2x32xf32> to vector<2x32xbf16>
    %cst_81 = arith.constant dense<0.000000e+00> : vector<2x128xf32>
    %392 = tpu.matmul %391, %1, %cst_81 {dimension_numbers = #tpu.dot_dimension_numbers<[1], [0], [0], [1], [0, 0, 1, 1], [], []>} : vector<2x32xbf16>, vector<32x128xbf16>, vector<2x128xf32> -> vector<2x128xf32>
    %cst_82 = arith.constant dense<0.000000e+00> : vector<2x128xf32>
    %393 = tpu.matmul %367, %2, %cst_82 {dimension_numbers = #tpu.dot_dimension_numbers<[1], [0], [0], [1], [0, 0, 1, 1], [], []>} : vector<2x32xbf16>, vector<32x128xbf16>, vector<2x128xf32> -> vector<2x128xf32>
    %394 = arith.addf %392, %393 : vector<2x128xf32>
    %395 = vector.broadcast %3 : vector<1x128xf32> to vector<2x128xf32>
    %396 = arith.addf %394, %395 : vector<2x128xf32>
    %397 = vector.broadcast %13 : vector<1x128xf32> to vector<2x128xf32>
    %398 = arith.mulf %396, %397 : vector<2x128xf32>
    %399 = arith.negf %398 : vector<2x128xf32>
    %400 = math.exp %399 : vector<2x128xf32>
    %cst_83 = arith.constant 1.000000e+00 : f32
    %401 = vector.broadcast %cst_83 : f32 to vector<2x128xf32>
    %402 = arith.addf %401, %400 : vector<2x128xf32>
    %403 = arith.divf %401, %402 : vector<2x128xf32>
    %404 = vector.extract_strided_slice %403 {offsets = [0, 0], sizes = [2, 32], strides = [1, 1]} : vector<2x128xf32> to vector<2x32xf32>
    %405 = vector.extract_strided_slice %403 {offsets = [0, 32], sizes = [2, 32], strides = [1, 1]} : vector<2x128xf32> to vector<2x32xf32>
    %406 = vector.extract_strided_slice %403 {offsets = [0, 64], sizes = [2, 32], strides = [1, 1]} : vector<2x128xf32> to vector<2x32xf32>
    %cst_84 = arith.constant 2.000000e+00 : f32
    %407 = vector.broadcast %cst_84 : f32 to vector<2x32xf32>
    %408 = arith.mulf %407, %406 : vector<2x32xf32>
    %cst_85 = arith.constant 1.000000e+00 : f32
    %409 = vector.broadcast %cst_85 : f32 to vector<2x32xf32>
    %410 = arith.subf %408, %409 : vector<2x32xf32>
    %411 = vector.extract_strided_slice %403 {offsets = [0, 96], sizes = [2, 32], strides = [1, 1]} : vector<2x128xf32> to vector<2x32xf32>
    %412 = arith.mulf %405, %364 : vector<2x32xf32>
    %413 = arith.mulf %404, %410 : vector<2x32xf32>
    %414 = arith.addf %412, %413 : vector<2x32xf32>
    %415 = math.tanh %414 : vector<2x32xf32>
    %416 = arith.mulf %411, %415 : vector<2x32xf32>
    %417 = arith.truncf %416 : vector<2x32xf32> to vector<2x32xbf16>
    %c0_86 = arith.constant 0 : index
    %c0_87 = arith.constant 0 : index
    %418 = vector.load %arg5[%c0_86, %c0_87] : memref<32x16xbf16, #tpu.memory_space<vmem>>, vector<32x16xbf16>
    %cst_88 = arith.constant dense<0.000000e+00> : vector<2x16xf32>
    %419 = tpu.matmul %417, %418, %cst_88 {dimension_numbers = #tpu.dot_dimension_numbers<[1], [0], [0], [1], [0, 0, 1, 1], [], []>} : vector<2x32xbf16>, vector<32x16xbf16>, vector<2x16xf32> -> vector<2x16xf32>
    %c0_89 = arith.constant 0 : index
    %c0_90 = arith.constant 0 : index
    %420 = vector.load %arg6[%c0_89, %c0_90] : memref<1x16xf32, #tpu.memory_space<vmem>>, vector<1x16xf32>
    %421 = vector.broadcast %420 : vector<1x16xf32> to vector<2x16xf32>
    %422 = arith.addf %419, %421 : vector<2x16xf32>
    %423 = arith.negf %422 : vector<2x16xf32>
    %424 = math.exp %423 : vector<2x16xf32>
    %cst_91 = arith.constant 1.000000e+00 : f32
    %425 = vector.broadcast %cst_91 : f32 to vector<2x16xf32>
    %426 = arith.addf %425, %424 : vector<2x16xf32>
    %427 = arith.divf %425, %426 : vector<2x16xf32>
    %428 = arith.truncf %427 : vector<2x16xf32> to vector<2x16xbf16>
    %c0_92 = arith.constant 0 : index
    %c0_93 = arith.constant 0 : index
    %429 = vector.load %arg7[%c0_92, %c0_93] : memref<16x5xbf16, #tpu.memory_space<vmem>>, vector<16x5xbf16>
    %cst_94 = arith.constant dense<0.000000e+00> : vector<2x5xf32>
    %430 = tpu.matmul %428, %429, %cst_94 {dimension_numbers = #tpu.dot_dimension_numbers<[1], [0], [0], [1], [0, 0, 1, 1], [], []>} : vector<2x16xbf16>, vector<16x5xbf16>, vector<2x5xf32> -> vector<2x5xf32>
    %c0_95 = arith.constant 0 : index
    %c0_96 = arith.constant 0 : index
    %431 = vector.load %arg8[%c0_95, %c0_96] : memref<1x5xf32, #tpu.memory_space<vmem>>, vector<1x5xf32>
    %432 = vector.broadcast %431 : vector<1x5xf32> to vector<2x5xf32>
    %433 = arith.addf %430, %432 : vector<2x5xf32>
    %c0_97 = arith.constant 0 : index
    %c0_98 = arith.constant 0 : index
    %434 = vector.load %arg9[%c0_97, %c0_98] : memref<2x5xf32, #tpu.memory_space<vmem>>, vector<2x5xf32>
    tpu.vector_store %arg9[%c0_97, %c0_98], %433 {strides = array<i32>} : memref<2x5xf32, #tpu.memory_space<vmem>>, vector<2x5xf32>,
    return
  }
}

</mosaic_0001>

<llo_original>
// kernel: easylstm_forward.1
$region0: #{easylstm_forward.1}
  #allocation0 [shape = 'u32[]', space=smem, size = 0x4, offset = 0x4, fixed_abs, tag = 'smem constant byte address 0x4 - core index']
  #allocation1 [shape = 'u32[72,128]{1,0:T(1,128)}', space=vmem, size = 0x9000, scoped, tag = 'internal scratch']
  %s0 = inlined_call_operand.vmem [shape: f32[16,128], index: 0, kind: input, shape index: {}]
  %s1 = inlined_call_operand.vmem [shape: bf16[32,128], index: 1, kind: input, shape index: {}]
  %s2 = inlined_call_operand.vmem [shape: bf16[32,128], index: 2, kind: input, shape index: {}]
  %s3 = inlined_call_operand.vmem [shape: bf16[32,128], index: 3, kind: input, shape index: {}]
  %s4 = inlined_call_operand.vmem [shape: f32[1,128], index: 4, kind: input, shape index: {}]
  %s5 = inlined_call_operand.vmem [shape: bf16[32,16], index: 5, kind: input, shape index: {}]
  %s6 = inlined_call_operand.vmem [shape: f32[1,16], index: 6, kind: input, shape index: {}]
  %s7 = inlined_call_operand.vmem [shape: bf16[16,5], index: 7, kind: input, shape index: {}]
  %s8 = inlined_call_operand.vmem [shape: f32[1,5], index: 8, kind: input, shape index: {}]
  %s9 = inlined_call_operand.hbm [shape: f32[2,5], index: 9, kind: output, shape index: {}]
  %s10 = sld [smem:[#allocation0]]
  $region46: #{easylstm_forward.1} parent=0
    _
  %s12 = ssub.s32 1, %s10
  %s13 = scalar_select 0, %s12, %s10
  $region1: #{easylstm_forward.1} parent=0
    #allocation2 [shape = 'u8[1024]{0}', space=vmem, size = 0x400, scoped, tag = 'output window, operand 0, single buffered']
    #allocation3 [shape = 's32[1]{0}', space=sflag, size = 0x4, scoped, tag = 'scoped memory for easylstm_forward.1']
    %14 = vsyncpa [#allocation3], 0
    // Predicated region
    $region2: #{easylstm_forward.1} parent=1 // pred_check
      _
    $region3: #{easylstm_forward.1} parent=1 // pred_check_branch
      %16 = sbr.rel (0) target = $region5
    $region4: #{easylstm_forward.1} parent=1 // pred_region
      _
    $region5: #{easylstm_forward.1} parent=1 // pred_fallthru
      _
    // Predicated region
    $region6: #{easylstm_forward.1} parent=1 // pred_check
      _
    $region7: #{easylstm_forward.1} parent=1 // pred_check_branch
      %18 = sbr.rel (0) target = $region9
    $region8: #{easylstm_forward.1} parent=1 // pred_region
      _
    $region9: #{easylstm_forward.1} parent=1 // pred_fallthru
      _
    // Predicated region
    $region10: #{easylstm_forward.1} parent=1 // pred_check
      _
    $region11: #{easylstm_forward.1} parent=1 // pred_check_branch
      %20 = sbr.rel (0) target = $region13
    $region12: #{easylstm_forward.1} parent=1 // pred_region
      _
    $region13: #{easylstm_forward.1} parent=1 // pred_fallthru
      _
    // Predicated region
    $region14: #{easylstm_forward.1} parent=1 // pred_check
      _
    $region15: #{easylstm_forward.1} parent=1 // pred_check_branch
      %22 = sbr.rel (0) target = $region17
    $region16: #{easylstm_forward.1} parent=1 // pred_region
      _
    $region17: #{easylstm_forward.1} parent=1 // pred_fallthru
      _
    // Predicated region
    $region18: #{easylstm_forward.1} parent=1 // pred_check
      _
    $region19: #{easylstm_forward.1} parent=1 // pred_check_branch
      %24 = sbr.rel (0) target = $region21
    $region20: #{easylstm_forward.1} parent=1 // pred_region
      _
    $region21: #{easylstm_forward.1} parent=1 // pred_fallthru
      _
    // Predicated region
    $region22: #{easylstm_forward.1} parent=1 // pred_check
      _
    $region23: #{easylstm_forward.1} parent=1 // pred_check_branch
      %26 = sbr.rel (0) target = $region25
    $region24: #{easylstm_forward.1} parent=1 // pred_region
      _
    $region25: #{easylstm_forward.1} parent=1 // pred_fallthru
      _
    // Predicated region
    $region26: #{easylstm_forward.1} parent=1 // pred_check
      _
    $region27: #{easylstm_forward.1} parent=1 // pred_check_branch
      %28 = sbr.rel (0) target = $region29
    $region28: #{easylstm_forward.1} parent=1 // pred_region
      _
    $region29: #{easylstm_forward.1} parent=1 // pred_fallthru
      _
    // Predicated region
    $region30: #{easylstm_forward.1} parent=1 // pred_check
      _
    $region31: #{easylstm_forward.1} parent=1 // pred_check_branch
      %30 = sbr.rel (0) target = $region33
    $region32: #{easylstm_forward.1} parent=1 // pred_region
      _
    $region33: #{easylstm_forward.1} parent=1 // pred_fallthru
      _
    // Predicated region
    $region34: #{easylstm_forward.1} parent=1 // pred_check
      _
    $region35: #{easylstm_forward.1} parent=1 // pred_check_branch
      %32 = sbr.rel (0) target = $region37
    $region36: #{easylstm_forward.1} parent=1 // pred_region
      _
    $region37: #{easylstm_forward.1} parent=1 // pred_fallthru
      _
    %v34 = vld [vmem:[%s1] sm:$0xf]
    %v35 = vld [vmem:[%s1 + $0x4] sm:$0xf]
    %v36 = vld [vmem:[%s1 + $0x8] sm:$0xf]
    %v37 = vld [vmem:[%s1 + $0xc] sm:$0xf]
    %v38 = vld [vmem:[%s2] sm:$0xf]
    %v39 = vld [vmem:[%s2 + $0x4] sm:$0xf]
    %v40 = vld [vmem:[%s2 + $0x8] sm:$0xf]
    %v41 = vld [vmem:[%s2 + $0xc] sm:$0xf]
    %v42 = vld [vmem:[%s3] sm:$0xf]
    %v43 = vld [vmem:[%s3 + $0x4] sm:$0xf]
    %v44 = vld [vmem:[%s3 + $0x8] sm:$0xf]
    %v45 = vld [vmem:[%s3 + $0xc] sm:$0xf]
    %v46 = vld [vmem:[%s4] sm:$0x1]
    %v47 = vld [vmem:[%s0] sm:$0xff]
    %v48 = vld [vmem:[%s0 + $0x8] sm:$0xff]
    %v49 = vlaneseq
    %v50 = vand.u32 %v49, 127
    %vm51 = vcmp.ge.s32.totalorder %v50, 64
    %vm52 = vcmp.lt.s32.totalorder %v50, 96
    %vm53 = vmand %vm51, %vm52
    %v54 = vsel %vm53, 2.0, 1.0
    %v59 = vunpack.c.l.b16 %v34
    %v60 = vunpack.c.l.b16 %v35
    %v61 = vunpack.c.l.b16 %v36
    %v62 = vunpack.c.l.b16 %v37
    %v63 = vpack.c.b16 %v60, %v59
    %v64 = vpack.c.b16 %v62, %v61
    %vm67 = vcmask 261120
    %v69 = vsel %vm67, 0, 0
    %71 = vmatpush.bf16.msra.mxu0 0
    %72 = vmatpush.bf16.msra.mxu0 0
    %73 = vmatpush.bf16.msra.mxu0 0
    %74 = vmatpush.bf16.msra.mxu0 0
    %75 = vmatpush.bf16.msra.mxu0 0
    %76 = vmatpush.bf16.msra.mxu0 0
    %77 = vmatpush.bf16.msra.mxu0 %v64
    %78 = vmatpush.bf16.msra.mxu0 %v63
    %79 = vmatmul.bf16.gmra.mxu0 %v69
    %v80 = vpop.f32.mrf.mxu0
    %v81 = vadd.f32 0.0, %v80
    %v82 = vpop.f32.mrf.mxu0
    %83 = vdwg.mxu0
    %v84 = vadd.f32 %v47, %v81
    %v85 = vmul.f32 %v84, %v54
    %v86 = vxor.u32 %v85, 2147483648
    %v87 = vmul.f32 %v86, 1.442695
    %v88 = vpow.pop %v87
    %v89 = vadd.f32 %v88, 1.0
    %v90 = vrcp.pop %v89
    %v91 = vmul.f32 %v89, %v90
    %v92 = vsub.f32 1.0, %v91
    %v93 = vmul.f32 %v90, %v92
    %v94 = vadd.f32 %v90, %v93
    %vm95 = vweird.f32 %v89
    %vm96 = vweird.f32 %v90
    %vm97 = vmor %vm95, %vm96
    %v98 = vsel %vm97, %v90, %v94
    %v99 = vand.u32 2147483647, %v89
    %vm100 = vcmp.eq.f32.partialorder %v99, 8.507059e+37
    %v101 = vand.u32 %v89, 2147483648
    %v102 = vor.u32 1.1754944e-38, %v101
    %v103 = vsel %vm100, %v102, %v98
    %v104 = vmul.f32 1.0, %v103
    %v105 = vmul.f32 %v104, 2.0
    %v106 = vsub.f32 %v105, 1.0
    %v107 = vmul.f32 %v104, 0.0
    %109 = vrot.lane.b32.xlu0 %v106, 64
    %v110 = vpop.permute.xlu0 %109
    %v112 = vmul.f32 %v104, %v110
    %114 = vrot.lane.b32.xlu0 %v112, 32
    %v115 = vpop.permute.xlu0 %114
    %v117 = vadd.f32 %v107, %v115
    %v118 = vtanh.pop %v117
    %120 = vrot.lane.b32.xlu0 %v118, 64
    %v121 = vpop.permute.xlu0 %120
    %v123 = vmul.f32 %v104, %v121
    %v124 = vpack.c.bf16 %v123, %v123
    %v129 = vunpack.c.l.b16 %v42
    %v130 = vunpack.c.l.b16 %v43
    %v131 = vunpack.c.l.b16 %v44
    %v132 = vunpack.c.l.b16 %v45
    %v133 = vpack.c.b16 %v130, %v129
    %v134 = vpack.c.b16 %v132, %v131
    %137 = vmatpush.bf16.msra.mxu0 0
    %138 = vmatpush.bf16.msra.mxu0 0
    %139 = vmatpush.bf16.msra.mxu0 0
    %140 = vmatpush.bf16.msra.mxu0 0
    %141 = vmatpush.bf16.msra.mxu0 0
    %142 = vmatpush.bf16.msra.mxu0 0
    %143 = vmatpush.bf16.msra.mxu0 %v134
    %144 = vmatpush.bf16.msra.mxu0 %v133
    %145 = vmatmul.bf16.gmra.mxu0 %v69
    %v146 = vpop.f32.mrf.mxu0
    %v147 = vadd.f32 0.0, %v146
    %v148 = vpop.f32.mrf.mxu0
    %149 = vdwg.mxu0
    %151 = vrot.lane.b32.xlu0 %v124, 32
    %v152 = vpop.permute.xlu0 %151
    %v157 = vunpack.c.l.b16 %v38
    %v158 = vunpack.c.l.b16 %v39
    %v159 = vunpack.c.l.b16 %v40
    %v160 = vunpack.c.l.b16 %v41
    %v161 = vpack.c.b16 %v158, %v157
    %v162 = vpack.c.b16 %v160, %v159
    %v166 = vsel %vm67, %v152, 0
    %168 = vmatpush.bf16.msra.mxu0 0
    %169 = vmatpush.bf16.msra.mxu0 0
    %170 = vmatpush.bf16.msra.mxu0 0
    %171 = vmatpush.bf16.msra.mxu0 0
    %172 = vmatpush.bf16.msra.mxu0 0
    %173 = vmatpush.bf16.msra.mxu0 0
    %174 = vmatpush.bf16.msra.mxu0 %v162
    %175 = vmatpush.bf16.msra.mxu0 %v161
    %176 = vmatmul.bf16.gmra.mxu0 %v166
    %v177 = vpop.f32.mrf.mxu0
    %v178 = vadd.f32 %v147, %v177
    %v179 = vpop.f32.mrf.mxu0
    %180 = vdwg.mxu0
    %v182 = vperm.slane %v46, 0
    %v184 = vadd.f32 %v178, %v182
    %v185 = vmul.f32 %v184, %v54
    %v186 = vxor.u32 %v185, 2147483648
    %v187 = vmul.f32 %v186, 1.442695
    %v188 = vpow.pop %v187
    %v189 = vadd.f32 %v188, 1.0
    %v190 = vrcp.pop %v189
    %v191 = vmul.f32 %v189, %v190
    %v192 = vsub.f32 1.0, %v191
    %v193 = vmul.f32 %v190, %v192
    %v194 = vadd.f32 %v190, %v193
    %vm195 = vweird.f32 %v189
    %vm196 = vweird.f32 %v190
    %vm197 = vmor %vm195, %vm196
    %v198 = vsel %vm197, %v190, %v194
    %v199 = vand.u32 2147483647, %v189
    %vm200 = vcmp.eq.f32.partialorder %v199, 8.507059e+37
    %v201 = vand.u32 %v189, 2147483648
    %v202 = vor.u32 1.1754944e-38, %v201
    %v203 = vsel %vm200, %v202, %v198
    %v204 = vmul.f32 1.0, %v203
    %v205 = vmul.f32 %v204, 2.0
    %v206 = vsub.f32 %v205, 1.0
    %v207 = vmul.f32 %v204, 0.0
    %209 = vrot.lane.b32.xlu0 %v206, 64
    %v210 = vpop.permute.xlu0 %209
    %v212 = vmul.f32 %v204, %v210
    %214 = vrot.lane.b32.xlu0 %v212, 32
    %v215 = vpop.permute.xlu0 %214
    %v217 = vadd.f32 %v207, %v215
    %v218 = vtanh.pop %v217
    %220 = vrot.lane.b32.xlu0 %v218, 64
    %v221 = vpop.permute.xlu0 %220
    %v223 = vmul.f32 %v204, %v221
    %v224 = vpack.c.bf16 %v223, %v223
    %225 = vmatpush.bf16.msra.mxu0 0
    %226 = vmatpush.bf16.msra.mxu0 0
    %227 = vmatpush.bf16.msra.mxu0 0
    %228 = vmatpush.bf16.msra.mxu0 0
    %229 = vmatpush.bf16.msra.mxu0 0
    %230 = vmatpush.bf16.msra.mxu0 0
    %231 = vmatpush.bf16.msra.mxu0 %v64
    %232 = vmatpush.bf16.msra.mxu0 %v63
    %233 = vmatmul.bf16.gmra.mxu0 %v166
    %v234 = vpop.f32.mrf.mxu0
    %v235 = vadd.f32 0.0, %v234
    %v236 = vpop.f32.mrf.mxu0
    %237 = vdwg.mxu0
    %v239 = vrot.slane %v235, 6
    %v241 = vadd.f32 %v47, %v239
    %v242 = vmul.f32 %v241, %v54
    %v243 = vxor.u32 %v242, 2147483648
    %v244 = vmul.f32 %v243, 1.442695
    %v245 = vpow.pop %v244
    %v246 = vadd.f32 %v245, 1.0
    %v247 = vrcp.pop %v246
    %v248 = vmul.f32 %v246, %v247
    %v249 = vsub.f32 1.0, %v248
    %v250 = vmul.f32 %v247, %v249
    %v251 = vadd.f32 %v247, %v250
    %vm252 = vweird.f32 %v246
    %vm253 = vweird.f32 %v247
    %vm254 = vmor %vm252, %vm253
    %v255 = vsel %vm254, %v247, %v251
    %v256 = vand.u32 2147483647, %v246
    %vm257 = vcmp.eq.f32.partialorder %v256, 8.507059e+37
    %v258 = vand.u32 %v246, 2147483648
    %v259 = vor.u32 1.1754944e-38, %v258
    %v260 = vsel %vm257, %v259, %v255
    %v261 = vmul.f32 1.0, %v260
    %v262 = vmul.f32 %v261, 2.0
    %v263 = vsub.f32 %v262, 1.0
    %v265 = vrot.slane %v117, 6
    %v267 = vmul.f32 %v261, %v265
    %269 = vrot.lane.b32.xlu0 %v263, 64
    %v270 = vpop.permute.xlu0 %269
    %v272 = vmul.f32 %v261, %v270
    %274 = vrot.lane.b32.xlu0 %v272, 32
    %v275 = vpop.permute.xlu0 %274
    %v277 = vadd.f32 %v267, %v275
    %v278 = vtanh.pop %v277
    %280 = vrot.lane.b32.xlu0 %v278, 64
    %v281 = vpop.permute.xlu0 %280
    %v283 = vmul.f32 %v261, %v281
    %v284 = vpack.c.bf16 %v283, %v283
    %286 = vrot.lane.b32.xlu0 %v224, 32
    %v287 = vpop.permute.xlu0 %286
    %v289 = vsel %vm67, %v287, 0
    %291 = vmatpush.bf16.msra.mxu0 0
    %292 = vmatpush.bf16.msra.mxu0 0
    %293 = vmatpush.bf16.msra.mxu0 0
    %294 = vmatpush.bf16.msra.mxu0 0
    %295 = vmatpush.bf16.msra.mxu0 0
    %296 = vmatpush.bf16.msra.mxu0 0
    %297 = vmatpush.bf16.msra.mxu0 %v134
    %298 = vmatpush.bf16.msra.mxu0 %v133
    %299 = vmatmul.bf16.gmra.mxu0 %v289
    %v300 = vpop.f32.mrf.mxu0
    %v301 = vadd.f32 0.0, %v300
    %v302 = vpop.f32.mrf.mxu0
    %303 = vdwg.mxu0
    %v305 = vrot.slane %v284, 1
    %306 = vrot.lane.b32.xlu0 %v305, 32
    %v307 = vpop.permute.xlu0 %306
    %v309 = vsel %vm67, %v307, 0
    %311 = vmatpush.bf16.msra.mxu0 0
    %312 = vmatpush.bf16.msra.mxu0 0
    %313 = vmatpush.bf16.msra.mxu0 0
    %314 = vmatpush.bf16.msra.mxu0 0
    %315 = vmatpush.bf16.msra.mxu0 0
    %316 = vmatpush.bf16.msra.mxu0 0
    %317 = vmatpush.bf16.msra.mxu0 %v162
    %318 = vmatpush.bf16.msra.mxu0 %v161
    %319 = vmatmul.bf16.gmra.mxu0 %v309
    %v320 = vpop.f32.mrf.mxu0
    %v321 = vadd.f32 %v301, %v320
    %v322 = vpop.f32.mrf.mxu0
    %323 = vdwg.mxu0
    %v324 = vadd.f32 %v321, %v182
    %v325 = vmul.f32 %v324, %v54
    %v326 = vxor.u32 %v325, 2147483648
    %v327 = vmul.f32 %v326, 1.442695
    %v328 = vpow.pop %v327
    %v329 = vadd.f32 %v328, 1.0
    %v330 = vrcp.pop %v329
    %v331 = vmul.f32 %v329, %v330
    %v332 = vsub.f32 1.0, %v331
    %v333 = vmul.f32 %v330, %v332
    %v334 = vadd.f32 %v330, %v333
    %vm335 = vweird.f32 %v329
    %vm336 = vweird.f32 %v330
    %vm337 = vmor %vm335, %vm336
    %v338 = vsel %vm337, %v330, %v334
    %v339 = vand.u32 2147483647, %v329
    %vm340 = vcmp.eq.f32.partialorder %v339, 8.507059e+37
    %v341 = vand.u32 %v329, 2147483648
    %v342 = vor.u32 1.1754944e-38, %v341
    %v343 = vsel %vm340, %v342, %v338
    %v344 = vmul.f32 1.0, %v343
    %v345 = vmul.f32 %v344, 2.0
    %v346 = vsub.f32 %v345, 1.0
    %v347 = vmul.f32 %v344, %v217
    %349 = vrot.lane.b32.xlu0 %v346, 64
    %v350 = vpop.permute.xlu0 %349
    %v352 = vmul.f32 %v344, %v350
    %354 = vrot.lane.b32.xlu0 %v352, 32
    %v355 = vpop.permute.xlu0 %354
    %v357 = vadd.f32 %v347, %v355
    %v358 = vtanh.pop %v357
    %360 = vrot.lane.b32.xlu0 %v358, 64
    %v361 = vpop.permute.xlu0 %360
    %v363 = vmul.f32 %v344, %v361
    %v364 = vpack.c.bf16 %v363, %v363
    %365 = vmatpush.bf16.msra.mxu0 0
    %366 = vmatpush.bf16.msra.mxu0 0
    %367 = vmatpush.bf16.msra.mxu0 0
    %368 = vmatpush.bf16.msra.mxu0 0
    %369 = vmatpush.bf16.msra.mxu0 0
    %370 = vmatpush.bf16.msra.mxu0 0
    %371 = vmatpush.bf16.msra.mxu0 %v64
    %372 = vmatpush.bf16.msra.mxu0 %v63
    %373 = vmatmul.bf16.gmra.mxu0 %v309
    %v374 = vpop.f32.mrf.mxu0
    %v375 = vadd.f32 0.0, %v374
    %v376 = vpop.f32.mrf.mxu0
    %377 = vdwg.mxu0
    %v379 = vrot.slane %v375, 4
    %v381 = vadd.f32 %v47, %v379
    %v382 = vmul.f32 %v381, %v54
    %v383 = vxor.u32 %v382, 2147483648
    %v384 = vmul.f32 %v383, 1.442695
    %v385 = vpow.pop %v384
    %v386 = vadd.f32 %v385, 1.0
    %v387 = vrcp.pop %v386
    %v388 = vmul.f32 %v386, %v387
    %v389 = vsub.f32 1.0, %v388
    %v390 = vmul.f32 %v387, %v389
    %v391 = vadd.f32 %v387, %v390
    %vm392 = vweird.f32 %v386
    %vm393 = vweird.f32 %v387
    %vm394 = vmor %vm392, %vm393
    %v395 = vsel %vm394, %v387, %v391
    %v396 = vand.u32 2147483647, %v386
    %vm397 = vcmp.eq.f32.partialorder %v396, 8.507059e+37
    %v398 = vand.u32 %v386, 2147483648
    %v399 = vor.u32 1.1754944e-38, %v398
    %v400 = vsel %vm397, %v399, %v395
    %v401 = vmul.f32 1.0, %v400
    %v402 = vmul.f32 %v401, 2.0
    %v403 = vsub.f32 %v402, 1.0
    %v405 = vrot.slane %v277, 6
    %v407 = vmul.f32 %v401, %v405
    %409 = vrot.lane.b32.xlu0 %v403, 64
    %v410 = vpop.permute.xlu0 %409
    %v412 = vmul.f32 %v401, %v410
    %414 = vrot.lane.b32.xlu0 %v412, 32
    %v415 = vpop.permute.xlu0 %414
    %v417 = vadd.f32 %v407, %v415
    %v418 = vtanh.pop %v417
    %420 = vrot.lane.b32.xlu0 %v418, 64
    %v421 = vpop.permute.xlu0 %420
    %v423 = vmul.f32 %v401, %v421
    %v424 = vpack.c.bf16 %v423, %v423
    %426 = vrot.lane.b32.xlu0 %v364, 32
    %v427 = vpop.permute.xlu0 %426
    %v429 = vsel %vm67, %v427, 0
    %431 = vmatpush.bf16.msra.mxu0 0
    %432 = vmatpush.bf16.msra.mxu0 0
    %433 = vmatpush.bf16.msra.mxu0 0
    %434 = vmatpush.bf16.msra.mxu0 0
    %435 = vmatpush.bf16.msra.mxu0 0
    %436 = vmatpush.bf16.msra.mxu0 0
    %437 = vmatpush.bf16.msra.mxu0 %v134
    %438 = vmatpush.bf16.msra.mxu0 %v133
    %439 = vmatmul.bf16.gmra.mxu0 %v429
    %v440 = vpop.f32.mrf.mxu0
    %v441 = vadd.f32 0.0, %v440
    %v442 = vpop.f32.mrf.mxu0
    %443 = vdwg.mxu0
    %v445 = vrot.slane %v424, 2
    %446 = vrot.lane.b32.xlu0 %v445, 32
    %v447 = vpop.permute.xlu0 %446
    %v449 = vsel %vm67, %v447, 0
    %451 = vmatpush.bf16.msra.mxu0 0
    %452 = vmatpush.bf16.msra.mxu0 0
    %453 = vmatpush.bf16.msra.mxu0 0
    %454 = vmatpush.bf16.msra.mxu0 0
    %455 = vmatpush.bf16.msra.mxu0 0
    %456 = vmatpush.bf16.msra.mxu0 0
    %457 = vmatpush.bf16.msra.mxu0 %v162
    %458 = vmatpush.bf16.msra.mxu0 %v161
    %459 = vmatmul.bf16.gmra.mxu0 %v449
    %v460 = vpop.f32.mrf.mxu0
    %v461 = vadd.f32 %v441, %v460
    %v462 = vpop.f32.mrf.mxu0
    %463 = vdwg.mxu0
    %v464 = vadd.f32 %v461, %v182
    %v465 = vmul.f32 %v464, %v54
    %v466 = vxor.u32 %v465, 2147483648
    %v467 = vmul.f32 %v466, 1.442695
    %v468 = vpow.pop %v467
    %v469 = vadd.f32 %v468, 1.0
    %v470 = vrcp.pop %v469
    %v471 = vmul.f32 %v469, %v470
    %v472 = vsub.f32 1.0, %v471
    %v473 = vmul.f32 %v470, %v472
    %v474 = vadd.f32 %v470, %v473
    %vm475 = vweird.f32 %v469
    %vm476 = vweird.f32 %v470
    %vm477 = vmor %vm475, %vm476
    %v478 = vsel %vm477, %v470, %v474
    %v479 = vand.u32 2147483647, %v469
    %vm480 = vcmp.eq.f32.partialorder %v479, 8.507059e+37
    %v481 = vand.u32 %v469, 2147483648
    %v482 = vor.u32 1.1754944e-38, %v481
    %v483 = vsel %vm480, %v482, %v478
    %v484 = vmul.f32 1.0, %v483
    %v485 = vmul.f32 %v484, 2.0
    %v486 = vsub.f32 %v485, 1.0
    %v487 = vmul.f32 %v484, %v357
    %489 = vrot.lane.b32.xlu0 %v486, 64
    %v490 = vpop.permute.xlu0 %489
    %v492 = vmul.f32 %v484, %v490
    %494 = vrot.lane.b32.xlu0 %v492, 32
    %v495 = vpop.permute.xlu0 %494
    %v497 = vadd.f32 %v487, %v495
    %v498 = vtanh.pop %v497
    %500 = vrot.lane.b32.xlu0 %v498, 64
    %v501 = vpop.permute.xlu0 %500
    %v503 = vmul.f32 %v484, %v501
    %v504 = vpack.c.bf16 %v503, %v503
    %505 = vmatpush.bf16.msra.mxu0 0
    %506 = vmatpush.bf16.msra.mxu0 0
    %507 = vmatpush.bf16.msra.mxu0 0
    %508 = vmatpush.bf16.msra.mxu0 0
    %509 = vmatpush.bf16.msra.mxu0 0
    %510 = vmatpush.bf16.msra.mxu0 0
    %511 = vmatpush.bf16.msra.mxu0 %v64
    %512 = vmatpush.bf16.msra.mxu0 %v63
    %513 = vmatmul.bf16.gmra.mxu0 %v449
    %v514 = vpop.f32.mrf.mxu0
    %v515 = vadd.f32 0.0, %v514
    %v516 = vpop.f32.mrf.mxu0
    %517 = vdwg.mxu0
    %v519 = vrot.slane %v515, 2
    %v521 = vadd.f32 %v47, %v519
    %v522 = vmul.f32 %v521, %v54
    %v523 = vxor.u32 %v522, 2147483648
    %v524 = vmul.f32 %v523, 1.442695
    %v525 = vpow.pop %v524
    %v526 = vadd.f32 %v525, 1.0
    %v527 = vrcp.pop %v526
    %v528 = vmul.f32 %v526, %v527
    %v529 = vsub.f32 1.0, %v528
    %v530 = vmul.f32 %v527, %v529
    %v531 = vadd.f32 %v527, %v530
    %vm532 = vweird.f32 %v526
    %vm533 = vweird.f32 %v527
    %vm534 = vmor %vm532, %vm533
    %v535 = vsel %vm534, %v527, %v531
    %v536 = vand.u32 2147483647, %v526
    %vm537 = vcmp.eq.f32.partialorder %v536, 8.507059e+37
    %v538 = vand.u32 %v526, 2147483648
    %v539 = vor.u32 1.1754944e-38, %v538
    %v540 = vsel %vm537, %v539, %v535
    %v541 = vmul.f32 1.0, %v540
    %v542 = vmul.f32 %v541, 2.0
    %v543 = vsub.f32 %v542, 1.0
    %v545 = vrot.slane %v417, 6
    %v547 = vmul.f32 %v541, %v545
    %549 = vrot.lane.b32.xlu0 %v543, 64
    %v550 = vpop.permute.xlu0 %549
    %v552 = vmul.f32 %v541, %v550
    %554 = vrot.lane.b32.xlu0 %v552, 32
    %v555 = vpop.permute.xlu0 %554
    %v557 = vadd.f32 %v547, %v555
    %v558 = vtanh.pop %v557
    %560 = vrot.lane.b32.xlu0 %v558, 64
    %v561 = vpop.permute.xlu0 %560
    %v563 = vmul.f32 %v541, %v561
    %v564 = vpack.c.bf16 %v563, %v563
    %566 = vrot.lane.b32.xlu0 %v504, 32
    %v567 = vpop.permute.xlu0 %566
    %v569 = vsel %vm67, %v567, 0
    %571 = vmatpush.bf16.msra.mxu0 0
    %572 = vmatpush.bf16.msra.mxu0 0
    %573 = vmatpush.bf16.msra.mxu0 0
    %574 = vmatpush.bf16.msra.mxu0 0
    %575 = vmatpush.bf16.msra.mxu0 0
    %576 = vmatpush.bf16.msra.mxu0 0
    %577 = vmatpush.bf16.msra.mxu0 %v134
    %578 = vmatpush.bf16.msra.mxu0 %v133
    %579 = vmatmul.bf16.gmra.mxu0 %v569
    %v580 = vpop.f32.mrf.mxu0
    %v581 = vadd.f32 0.0, %v580
    %v582 = vpop.f32.mrf.mxu0
    %583 = vdwg.mxu0
    %v585 = vrot.slane %v564, 3
    %586 = vrot.lane.b32.xlu0 %v585, 32
    %v587 = vpop.permute.xlu0 %586
    %v589 = vsel %vm67, %v587, 0
    %591 = vmatpush.bf16.msra.mxu0 0
    %592 = vmatpush.bf16.msra.mxu0 0
    %593 = vmatpush.bf16.msra.mxu0 0
    %594 = vmatpush.bf16.msra.mxu0 0
    %595 = vmatpush.bf16.msra.mxu0 0
    %596 = vmatpush.bf16.msra.mxu0 0
    %597 = vmatpush.bf16.msra.mxu0 %v162
    %598 = vmatpush.bf16.msra.mxu0 %v161
    %599 = vmatmul.bf16.gmra.mxu0 %v589
    %v600 = vpop.f32.mrf.mxu0
    %v601 = vadd.f32 %v581, %v600
    %v602 = vpop.f32.mrf.mxu0
    %603 = vdwg.mxu0
    %v604 = vadd.f32 %v601, %v182
    %v605 = vmul.f32 %v604, %v54
    %v606 = vxor.u32 %v605, 2147483648
    %v607 = vmul.f32 %v606, 1.442695
    %v608 = vpow.pop %v607
    %v609 = vadd.f32 %v608, 1.0
    %v610 = vrcp.pop %v609
    %v611 = vmul.f32 %v609, %v610
    %v612 = vsub.f32 1.0, %v611
    %v613 = vmul.f32 %v610, %v612
    %v614 = vadd.f32 %v610, %v613
    %vm615 = vweird.f32 %v609
    %vm616 = vweird.f32 %v610
    %vm617 = vmor %vm615, %vm616
    %v618 = vsel %vm617, %v610, %v614
    %v619 = vand.u32 2147483647, %v609
    %vm620 = vcmp.eq.f32.partialorder %v619, 8.507059e+37
    %v621 = vand.u32 %v609, 2147483648
    %v622 = vor.u32 1.1754944e-38, %v621
    %v623 = vsel %vm620, %v622, %v618
    %v624 = vmul.f32 1.0, %v623
    %v625 = vmul.f32 %v624, 2.0
    %v626 = vsub.f32 %v625, 1.0
    %v627 = vmul.f32 %v624, %v497
    %629 = vrot.lane.b32.xlu0 %v626, 64
    %v630 = vpop.permute.xlu0 %629
    %v632 = vmul.f32 %v624, %v630
    %634 = vrot.lane.b32.xlu0 %v632, 32
    %v635 = vpop.permute.xlu0 %634
    %v637 = vadd.f32 %v627, %v635
    %v638 = vtanh.pop %v637
    %640 = vrot.lane.b32.xlu0 %v638, 64
    %v641 = vpop.permute.xlu0 %640
    %v643 = vmul.f32 %v624, %v641
    %v644 = vpack.c.bf16 %v643, %v643
    %645 = vmatpush.bf16.msra.mxu0 0
    %646 = vmatpush.bf16.msra.mxu0 0
    %647 = vmatpush.bf16.msra.mxu0 0
    %648 = vmatpush.bf16.msra.mxu0 0
    %649 = vmatpush.bf16.msra.mxu0 0
    %650 = vmatpush.bf16.msra.mxu0 0
    %651 = vmatpush.bf16.msra.mxu0 %v64
    %652 = vmatpush.bf16.msra.mxu0 %v63
    %653 = vmatmul.bf16.gmra.mxu0 %v589
    %v654 = vpop.f32.mrf.mxu0
    %v655 = vadd.f32 0.0, %v654
    %v656 = vpop.f32.mrf.mxu0
    %657 = vdwg.mxu0
    %v658 = vadd.f32 %v48, %v655
    %v659 = vmul.f32 %v658, %v54
    %v660 = vxor.u32 %v659, 2147483648
    %v661 = vmul.f32 %v660, 1.442695
    %v662 = vpow.pop %v661
    %v663 = vadd.f32 %v662, 1.0
    %v664 = vrcp.pop %v663
    %v665 = vmul.f32 %v663, %v664
    %v666 = vsub.f32 1.0, %v665
    %v667 = vmul.f32 %v664, %v666
    %v668 = vadd.f32 %v664, %v667
    %vm669 = vweird.f32 %v663
    %vm670 = vweird.f32 %v664
    %vm671 = vmor %vm669, %vm670
    %v672 = vsel %vm671, %v664, %v668
    %v673 = vand.u32 2147483647, %v663
    %vm674 = vcmp.eq.f32.partialorder %v673, 8.507059e+37
    %v675 = vand.u32 %v663, 2147483648
    %v676 = vor.u32 1.1754944e-38, %v675
    %v677 = vsel %vm674, %v676, %v672
    %v678 = vmul.f32 1.0, %v677
    %v679 = vmul.f32 %v678, 2.0
    %v680 = vsub.f32 %v679, 1.0
    %v682 = vrot.slane %v557, 6
    %v684 = vmul.f32 %v678, %v682
    %686 = vrot.lane.b32.xlu0 %v680, 64
    %v687 = vpop.permute.xlu0 %686
    %v689 = vmul.f32 %v678, %v687
    %691 = vrot.lane.b32.xlu0 %v689, 32
    %v692 = vpop.permute.xlu0 %691
    %v694 = vadd.f32 %v684, %v692
    %v695 = vtanh.pop %v694
    %697 = vrot.lane.b32.xlu0 %v695, 64
    %v698 = vpop.permute.xlu0 %697
    %v700 = vmul.f32 %v678, %v698
    %v701 = vpack.c.bf16 %v700, %v700
    %703 = vrot.lane.b32.xlu0 %v644, 32
    %v704 = vpop.permute.xlu0 %703
    %v706 = vsel %vm67, %v704, 0
    %708 = vmatpush.bf16.msra.mxu0 0
    %709 = vmatpush.bf16.msra.mxu0 0
    %710 = vmatpush.bf16.msra.mxu0 0
    %711 = vmatpush.bf16.msra.mxu0 0
    %712 = vmatpush.bf16.msra.mxu0 0
    %713 = vmatpush.bf16.msra.mxu0 0
    %714 = vmatpush.bf16.msra.mxu0 %v134
    %715 = vmatpush.bf16.msra.mxu0 %v133
    %716 = vmatmul.bf16.gmra.mxu0 %v706
    %v717 = vpop.f32.mrf.mxu0
    %v718 = vadd.f32 0.0, %v717
    %v719 = vpop.f32.mrf.mxu0
    %720 = vdwg.mxu0
    %722 = vrot.lane.b32.xlu0 %v701, 32
    %v723 = vpop.permute.xlu0 %722
    %v725 = vsel %vm67, %v723, 0
    %727 = vmatpush.bf16.msra.mxu0 0
    %728 = vmatpush.bf16.msra.mxu0 0
    %729 = vmatpush.bf16.msra.mxu0 0
    %730 = vmatpush.bf16.msra.mxu0 0
    %731 = vmatpush.bf16.msra.mxu0 0
    %732 = vmatpush.bf16.msra.mxu0 0
    %733 = vmatpush.bf16.msra.mxu0 %v162
    %734 = vmatpush.bf16.msra.mxu0 %v161
    %735 = vmatmul.bf16.gmra.mxu0 %v725
    %v736 = vpop.f32.mrf.mxu0
    %v737 = vadd.f32 %v718, %v736
    %v738 = vpop.f32.mrf.mxu0
    %739 = vdwg.mxu0
    %v740 = vadd.f32 %v737, %v182
    %v741 = vmul.f32 %v740, %v54
    %v742 = vxor.u32 %v741, 2147483648
    %v743 = vmul.f32 %v742, 1.442695
    %v744 = vpow.pop %v743
    %v745 = vadd.f32 %v744, 1.0
    %v746 = vrcp.pop %v745
    %v747 = vmul.f32 %v745, %v746
    %v748 = vsub.f32 1.0, %v747
    %v749 = vmul.f32 %v746, %v748
    %v750 = vadd.f32 %v746, %v749
    %vm751 = vweird.f32 %v745
    %vm752 = vweird.f32 %v746
    %vm753 = vmor %vm751, %vm752
    %v754 = vsel %vm753, %v746, %v750
    %v755 = vand.u32 2147483647, %v745
    %vm756 = vcmp.eq.f32.partialorder %v755, 8.507059e+37
    %v757 = vand.u32 %v745, 2147483648
    %v758 = vor.u32 1.1754944e-38, %v757
    %v759 = vsel %vm756, %v758, %v754
    %v760 = vmul.f32 1.0, %v759
    %v761 = vmul.f32 %v760, 2.0
    %v762 = vsub.f32 %v761, 1.0
    %v763 = vmul.f32 %v760, %v637
    %765 = vrot.lane.b32.xlu0 %v762, 64
    %v766 = vpop.permute.xlu0 %765
    %v768 = vmul.f32 %v760, %v766
    %770 = vrot.lane.b32.xlu0 %v768, 32
    %v771 = vpop.permute.xlu0 %770
    %v773 = vadd.f32 %v763, %v771
    %v774 = vtanh.pop %v773
    %776 = vrot.lane.b32.xlu0 %v774, 64
    %v777 = vpop.permute.xlu0 %776
    %v779 = vmul.f32 %v760, %v777
    %v780 = vpack.c.bf16 %v779, %v779
    %781 = vmatpush.bf16.msra.mxu0 0
    %782 = vmatpush.bf16.msra.mxu0 0
    %783 = vmatpush.bf16.msra.mxu0 0
    %784 = vmatpush.bf16.msra.mxu0 0
    %785 = vmatpush.bf16.msra.mxu0 0
    %786 = vmatpush.bf16.msra.mxu0 0
    %787 = vmatpush.bf16.msra.mxu0 %v64
    %788 = vmatpush.bf16.msra.mxu0 %v63
    %789 = vmatmul.bf16.gmra.mxu0 %v725
    %v790 = vpop.f32.mrf.mxu0
    %v791 = vadd.f32 0.0, %v790
    %v792 = vpop.f32.mrf.mxu0
    %793 = vdwg.mxu0
    %v795 = vrot.slane %v791, 6
    %v797 = vadd.f32 %v48, %v795
    %v798 = vmul.f32 %v797, %v54
    %v799 = vxor.u32 %v798, 2147483648
    %v800 = vmul.f32 %v799, 1.442695
    %v801 = vpow.pop %v800
    %v802 = vadd.f32 %v801, 1.0
    %v803 = vrcp.pop %v802
    %v804 = vmul.f32 %v802, %v803
    %v805 = vsub.f32 1.0, %v804
    %v806 = vmul.f32 %v803, %v805
    %v807 = vadd.f32 %v803, %v806
    %vm808 = vweird.f32 %v802
    %vm809 = vweird.f32 %v803
    %vm810 = vmor %vm808, %vm809
    %v811 = vsel %vm810, %v803, %v807
    %v812 = vand.u32 2147483647, %v802
    %vm813 = vcmp.eq.f32.partialorder %v812, 8.507059e+37
    %v814 = vand.u32 %v802, 2147483648
    %v815 = vor.u32 1.1754944e-38, %v814
    %v816 = vsel %vm813, %v815, %v811
    %v817 = vmul.f32 1.0, %v816
    %v818 = vmul.f32 %v817, 2.0
    %v819 = vsub.f32 %v818, 1.0
    %v821 = vrot.slane %v694, 6
    %v823 = vmul.f32 %v817, %v821
    %825 = vrot.lane.b32.xlu0 %v819, 64
    %v826 = vpop.permute.xlu0 %825
    %v828 = vmul.f32 %v817, %v826
    %830 = vrot.lane.b32.xlu0 %v828, 32
    %v831 = vpop.permute.xlu0 %830
    %v833 = vadd.f32 %v823, %v831
    %v834 = vtanh.pop %v833
    %836 = vrot.lane.b32.xlu0 %v834, 64
    %v837 = vpop.permute.xlu0 %836
    %v839 = vmul.f32 %v817, %v837
    %v840 = vpack.c.bf16 %v839, %v839
    %842 = vrot.lane.b32.xlu0 %v780, 32
    %v843 = vpop.permute.xlu0 %842
    %v845 = vsel %vm67, %v843, 0
    %847 = vmatpush.bf16.msra.mxu0 0
    %848 = vmatpush.bf16.msra.mxu0 0
    %849 = vmatpush.bf16.msra.mxu0 0
    %850 = vmatpush.bf16.msra.mxu0 0
    %851 = vmatpush.bf16.msra.mxu0 0
    %852 = vmatpush.bf16.msra.mxu0 0
    %853 = vmatpush.bf16.msra.mxu0 %v134
    %854 = vmatpush.bf16.msra.mxu0 %v133
    %855 = vmatmul.bf16.gmra.mxu0 %v845
    %v856 = vpop.f32.mrf.mxu0
    %v857 = vadd.f32 0.0, %v856
    %v858 = vpop.f32.mrf.mxu0
    %859 = vdwg.mxu0
    %v861 = vrot.slane %v840, 1
    %862 = vrot.lane.b32.xlu0 %v861, 32
    %v863 = vpop.permute.xlu0 %862
    %v865 = vsel %vm67, %v863, 0
    %867 = vmatpush.bf16.msra.mxu0 0
    %868 = vmatpush.bf16.msra.mxu0 0
    %869 = vmatpush.bf16.msra.mxu0 0
    %870 = vmatpush.bf16.msra.mxu0 0
    %871 = vmatpush.bf16.msra.mxu0 0
    %872 = vmatpush.bf16.msra.mxu0 0
    %873 = vmatpush.bf16.msra.mxu0 %v162
    %874 = vmatpush.bf16.msra.mxu0 %v161
    %875 = vmatmul.bf16.gmra.mxu0 %v865
    %v876 = vpop.f32.mrf.mxu0
    %v877 = vadd.f32 %v857, %v876
    %v878 = vpop.f32.mrf.mxu0
    %879 = vdwg.mxu0
    %v880 = vadd.f32 %v877, %v182
    %v881 = vmul.f32 %v880, %v54
    %v882 = vxor.u32 %v881, 2147483648
    %v883 = vmul.f32 %v882, 1.442695
    %v884 = vpow.pop %v883
    %v885 = vadd.f32 %v884, 1.0
    %v886 = vrcp.pop %v885
    %v887 = vmul.f32 %v885, %v886
    %v888 = vsub.f32 1.0, %v887
    %v889 = vmul.f32 %v886, %v888
    %v890 = vadd.f32 %v886, %v889
    %vm891 = vweird.f32 %v885
    %vm892 = vweird.f32 %v886
    %vm893 = vmor %vm891, %vm892
    %v894 = vsel %vm893, %v886, %v890
    %v895 = vand.u32 2147483647, %v885
    %vm896 = vcmp.eq.f32.partialorder %v895, 8.507059e+37
    %v897 = vand.u32 %v885, 2147483648
    %v898 = vor.u32 1.1754944e-38, %v897
    %v899 = vsel %vm896, %v898, %v894
    %v900 = vmul.f32 1.0, %v899
    %v901 = vmul.f32 %v900, 2.0
    %v902 = vsub.f32 %v901, 1.0
    %v903 = vmul.f32 %v900, %v773
    %905 = vrot.lane.b32.xlu0 %v902, 64
    %v906 = vpop.permute.xlu0 %905
    %v908 = vmul.f32 %v900, %v906
    %910 = vrot.lane.b32.xlu0 %v908, 32
    %v911 = vpop.permute.xlu0 %910
    %v913 = vadd.f32 %v903, %v911
    %v914 = vtanh.pop %v913
    %916 = vrot.lane.b32.xlu0 %v914, 64
    %v917 = vpop.permute.xlu0 %916
    %v919 = vmul.f32 %v900, %v917
    %v920 = vpack.c.bf16 %v919, %v919
    %921 = vmatpush.bf16.msra.mxu0 0
    %922 = vmatpush.bf16.msra.mxu0 0
    %923 = vmatpush.bf16.msra.mxu0 0
    %924 = vmatpush.bf16.msra.mxu0 0
    %925 = vmatpush.bf16.msra.mxu0 0
    %926 = vmatpush.bf16.msra.mxu0 0
    %927 = vmatpush.bf16.msra.mxu0 %v64
    %928 = vmatpush.bf16.msra.mxu0 %v63
    %929 = vmatmul.bf16.gmra.mxu0 %v865
    %v930 = vpop.f32.mrf.mxu0
    %v931 = vadd.f32 0.0, %v930
    %v932 = vpop.f32.mrf.mxu0
    %933 = vdwg.mxu0
    %v935 = vrot.slane %v931, 4
    %v937 = vadd.f32 %v48, %v935
    %v938 = vmul.f32 %v937, %v54
    %v939 = vxor.u32 %v938, 2147483648
    %v940 = vmul.f32 %v939, 1.442695
    %v941 = vpow.pop %v940
    %v942 = vadd.f32 %v941, 1.0
    %v943 = vrcp.pop %v942
    %v944 = vmul.f32 %v942, %v943
    %v945 = vsub.f32 1.0, %v944
    %v946 = vmul.f32 %v943, %v945
    %v947 = vadd.f32 %v943, %v946
    %vm948 = vweird.f32 %v942
    %vm949 = vweird.f32 %v943
    %vm950 = vmor %vm948, %vm949
    %v951 = vsel %vm950, %v943, %v947
    %v952 = vand.u32 2147483647, %v942
    %vm953 = vcmp.eq.f32.partialorder %v952, 8.507059e+37
    %v954 = vand.u32 %v942, 2147483648
    %v955 = vor.u32 1.1754944e-38, %v954
    %v956 = vsel %vm953, %v955, %v951
    %v957 = vmul.f32 1.0, %v956
    %v958 = vmul.f32 %v957, 2.0
    %v959 = vsub.f32 %v958, 1.0
    %v961 = vrot.slane %v833, 6
    %v963 = vmul.f32 %v957, %v961
    %965 = vrot.lane.b32.xlu0 %v959, 64
    %v966 = vpop.permute.xlu0 %965
    %v968 = vmul.f32 %v957, %v966
    %970 = vrot.lane.b32.xlu0 %v968, 32
    %v971 = vpop.permute.xlu0 %970
    %v973 = vadd.f32 %v963, %v971
    %v974 = vtanh.pop %v973
    %976 = vrot.lane.b32.xlu0 %v974, 64
    %v977 = vpop.permute.xlu0 %976
    %v979 = vmul.f32 %v957, %v977
    %v980 = vpack.c.bf16 %v979, %v979
    %982 = vrot.lane.b32.xlu0 %v920, 32
    %v983 = vpop.permute.xlu0 %982
    %v985 = vsel %vm67, %v983, 0
    %987 = vmatpush.bf16.msra.mxu0 0
    %988 = vmatpush.bf16.msra.mxu0 0
    %989 = vmatpush.bf16.msra.mxu0 0
    %990 = vmatpush.bf16.msra.mxu0 0
    %991 = vmatpush.bf16.msra.mxu0 0
    %992 = vmatpush.bf16.msra.mxu0 0
    %993 = vmatpush.bf16.msra.mxu0 %v134
    %994 = vmatpush.bf16.msra.mxu0 %v133
    %995 = vmatmul.bf16.gmra.mxu0 %v985
    %v996 = vpop.f32.mrf.mxu0
    %v997 = vadd.f32 0.0, %v996
    %v998 = vpop.f32.mrf.mxu0
    %999 = vdwg.mxu0
    %v1001 = vrot.slane %v980, 2
    %1002 = vrot.lane.b32.xlu0 %v1001, 32
    %v1003 = vpop.permute.xlu0 %1002
    %v1005 = vsel %vm67, %v1003, 0
    %1007 = vmatpush.bf16.msra.mxu0 0
    %1008 = vmatpush.bf16.msra.mxu0 0
    %1009 = vmatpush.bf16.msra.mxu0 0
    %1010 = vmatpush.bf16.msra.mxu0 0
    %1011 = vmatpush.bf16.msra.mxu0 0
    %1012 = vmatpush.bf16.msra.mxu0 0
    %1013 = vmatpush.bf16.msra.mxu0 %v162
    %1014 = vmatpush.bf16.msra.mxu0 %v161
    %1015 = vmatmul.bf16.gmra.mxu0 %v1005
    %v1016 = vpop.f32.mrf.mxu0
    %v1017 = vadd.f32 %v997, %v1016
    %v1018 = vpop.f32.mrf.mxu0
    %1019 = vdwg.mxu0
    %v1020 = vadd.f32 %v1017, %v182
    %v1021 = vmul.f32 %v1020, %v54
    %v1022 = vxor.u32 %v1021, 2147483648
    %v1023 = vmul.f32 %v1022, 1.442695
    %v1024 = vpow.pop %v1023
    %v1025 = vadd.f32 %v1024, 1.0
    %v1026 = vrcp.pop %v1025
    %v1027 = vmul.f32 %v1025, %v1026
    %v1028 = vsub.f32 1.0, %v1027
    %v1029 = vmul.f32 %v1026, %v1028
    %v1030 = vadd.f32 %v1026, %v1029
    %vm1031 = vweird.f32 %v1025
    %vm1032 = vweird.f32 %v1026
    %vm1033 = vmor %vm1031, %vm1032
    %v1034 = vsel %vm1033, %v1026, %v1030
    %v1035 = vand.u32 2147483647, %v1025
    %vm1036 = vcmp.eq.f32.partialorder %v1035, 8.507059e+37
    %v1037 = vand.u32 %v1025, 2147483648
    %v1038 = vor.u32 1.1754944e-38, %v1037
    %v1039 = vsel %vm1036, %v1038, %v1034
    %v1040 = vmul.f32 1.0, %v1039
    %v1041 = vmul.f32 %v1040, 2.0
    %v1042 = vsub.f32 %v1041, 1.0
    %v1043 = vmul.f32 %v1040, %v913
    %1045 = vrot.lane.b32.xlu0 %v1042, 64
    %v1046 = vpop.permute.xlu0 %1045
    %v1048 = vmul.f32 %v1040, %v1046
    %1050 = vrot.lane.b32.xlu0 %v1048, 32
    %v1051 = vpop.permute.xlu0 %1050
    %v1053 = vadd.f32 %v1043, %v1051
    %v1054 = vtanh.pop %v1053
    %1056 = vrot.lane.b32.xlu0 %v1054, 64
    %v1057 = vpop.permute.xlu0 %1056
    %v1059 = vmul.f32 %v1040, %v1057
    %v1060 = vpack.c.bf16 %v1059, %v1059
    %1061 = vmatpush.bf16.msra.mxu0 0
    %1062 = vmatpush.bf16.msra.mxu0 0
    %1063 = vmatpush.bf16.msra.mxu0 0
    %1064 = vmatpush.bf16.msra.mxu0 0
    %1065 = vmatpush.bf16.msra.mxu0 0
    %1066 = vmatpush.bf16.msra.mxu0 0
    %1067 = vmatpush.bf16.msra.mxu0 %v64
    %1068 = vmatpush.bf16.msra.mxu0 %v63
    %1069 = vmatmul.bf16.gmra.mxu0 %v1005
    %v1070 = vpop.f32.mrf.mxu0
    %v1071 = vadd.f32 0.0, %v1070
    %v1072 = vpop.f32.mrf.mxu0
    %1073 = vdwg.mxu0
    %v1075 = vrot.slane %v1071, 2
    %v1077 = vadd.f32 %v48, %v1075
    %v1078 = vmul.f32 %v1077, %v54
    %v1079 = vxor.u32 %v1078, 2147483648
    %v1080 = vmul.f32 %v1079, 1.442695
    %v1081 = vpow.pop %v1080
    %v1082 = vadd.f32 %v1081, 1.0
    %v1083 = vrcp.pop %v1082
    %v1084 = vmul.f32 %v1082, %v1083
    %v1085 = vsub.f32 1.0, %v1084
    %v1086 = vmul.f32 %v1083, %v1085
    %v1087 = vadd.f32 %v1083, %v1086
    %vm1088 = vweird.f32 %v1082
    %vm1089 = vweird.f32 %v1083
    %vm1090 = vmor %vm1088, %vm1089
    %v1091 = vsel %vm1090, %v1083, %v1087
    %v1092 = vand.u32 2147483647, %v1082
    %vm1093 = vcmp.eq.f32.partialorder %v1092, 8.507059e+37
    %v1094 = vand.u32 %v1082, 2147483648
    %v1095 = vor.u32 1.1754944e-38, %v1094
    %v1096 = vsel %vm1093, %v1095, %v1091
    %v1097 = vmul.f32 1.0, %v1096
    %v1098 = vmul.f32 %v1097, 2.0
    %v1099 = vsub.f32 %v1098, 1.0
    %v1101 = vrot.slane %v973, 6
    %v1103 = vmul.f32 %v1097, %v1101
    %1105 = vrot.lane.b32.xlu0 %v1099, 64
    %v1106 = vpop.permute.xlu0 %1105
    %v1108 = vmul.f32 %v1097, %v1106
    %1110 = vrot.lane.b32.xlu0 %v1108, 32
    %v1111 = vpop.permute.xlu0 %1110
    %v1113 = vadd.f32 %v1103, %v1111
    %v1114 = vtanh.pop %v1113
    %1116 = vrot.lane.b32.xlu0 %v1114, 64
    %v1117 = vpop.permute.xlu0 %1116
    %v1119 = vmul.f32 %v1097, %v1117
    %v1120 = vpack.c.bf16 %v1119, %v1119
    %1122 = vrot.lane.b32.xlu0 %v1060, 32
    %v1123 = vpop.permute.xlu0 %1122
    %v1125 = vsel %vm67, %v1123, 0
    %1127 = vmatpush.bf16.msra.mxu0 0
    %1128 = vmatpush.bf16.msra.mxu0 0
    %1129 = vmatpush.bf16.msra.mxu0 0
    %1130 = vmatpush.bf16.msra.mxu0 0
    %1131 = vmatpush.bf16.msra.mxu0 0
    %1132 = vmatpush.bf16.msra.mxu0 0
    %1133 = vmatpush.bf16.msra.mxu0 %v134
    %1134 = vmatpush.bf16.msra.mxu0 %v133
    %1135 = vmatmul.bf16.gmra.mxu0 %v1125
    %v1136 = vpop.f32.mrf.mxu0
    %v1137 = vadd.f32 0.0, %v1136
    %v1138 = vpop.f32.mrf.mxu0
    %1139 = vdwg.mxu0
    %v1141 = vrot.slane %v1120, 3
    %1142 = vrot.lane.b32.xlu0 %v1141, 32
    %v1143 = vpop.permute.xlu0 %1142
    %v1145 = vsel %vm67, %v1143, 0
    %1147 = vmatpush.bf16.msra.mxu0 0
    %1148 = vmatpush.bf16.msra.mxu0 0
    %1149 = vmatpush.bf16.msra.mxu0 0
    %1150 = vmatpush.bf16.msra.mxu0 0
    %1151 = vmatpush.bf16.msra.mxu0 0
    %1152 = vmatpush.bf16.msra.mxu0 0
    %1153 = vmatpush.bf16.msra.mxu0 %v162
    %1154 = vmatpush.bf16.msra.mxu0 %v161
    %1155 = vmatmul.bf16.gmra.mxu0 %v1145
    %v1156 = vpop.f32.mrf.mxu0
    %v1157 = vadd.f32 %v1137, %v1156
    %v1158 = vpop.f32.mrf.mxu0
    %1159 = vdwg.mxu0
    %v1160 = vadd.f32 %v1157, %v182
    %v1161 = vmul.f32 %v1160, %v54
    %v1162 = vxor.u32 %v1161, 2147483648
    %v1163 = vmul.f32 %v1162, 1.442695
    %v1164 = vpow.pop %v1163
    %v1165 = vadd.f32 %v1164, 1.0
    %v1166 = vrcp.pop %v1165
    %v1167 = vmul.f32 %v1165, %v1166
    %v1168 = vsub.f32 1.0, %v1167
    %v1169 = vmul.f32 %v1166, %v1168
    %v1170 = vadd.f32 %v1166, %v1169
    %vm1171 = vweird.f32 %v1165
    %vm1172 = vweird.f32 %v1166
    %vm1173 = vmor %vm1171, %vm1172
    %v1174 = vsel %vm1173, %v1166, %v1170
    %v1175 = vand.u32 2147483647, %v1165
    %vm1176 = vcmp.eq.f32.partialorder %v1175, 8.507059e+37
    %v1177 = vand.u32 %v1165, 2147483648
    %v1178 = vor.u32 1.1754944e-38, %v1177
    %v1179 = vsel %vm1176, %v1178, %v1174
    %v1180 = vmul.f32 1.0, %v1179
    %v1181 = vmul.f32 %v1180, 2.0
    %v1182 = vsub.f32 %v1181, 1.0
    %v1183 = vmul.f32 %v1180, %v1053
    %1185 = vrot.lane.b32.xlu0 %v1182, 64
    %v1186 = vpop.permute.xlu0 %1185
    %v1188 = vmul.f32 %v1180, %v1186
    %1190 = vrot.lane.b32.xlu0 %v1188, 32
    %v1191 = vpop.permute.xlu0 %1190
    %v1193 = vadd.f32 %v1183, %v1191
    %v1194 = vtanh.pop %v1193
    %1196 = vrot.lane.b32.xlu0 %v1194, 64
    %v1197 = vpop.permute.xlu0 %1196
    %v1199 = vmul.f32 %v1180, %v1197
    %v1200 = vpack.c.bf16 %v1199, %v1199
    %v1201 = vld [vmem:[%s5] sm:$0xf]
    %v1202 = vld [vmem:[%s5 + $0x4] sm:$0xf]
    %v1203 = vld [vmem:[%s5 + $0x8] sm:$0xf]
    %v1204 = vld [vmem:[%s5 + $0xc] sm:$0xf]
    %v1205 = vld [vmem:[%s6] sm:$0x1]
    %v1207 = vperm.slane %v1205, 0
    %1210 = vrot.lane.b32.xlu0 %v1200, 32
    %v1211 = vpop.permute.xlu0 %1210
    %v1216 = vunpack.c.l.b16 %v1201
    %v1217 = vunpack.c.l.b16 %v1202
    %v1218 = vunpack.c.l.b16 %v1203
    %v1219 = vunpack.c.l.b16 %v1204
    %v1220 = vpack.c.b16 %v1217, %v1216
    %v1221 = vpack.c.b16 %v1219, %v1218
    %v1225 = vsel %vm67, %v1211, 0
    %1227 = vmatpush.bf16.msra.mxu0 0
    %1228 = vmatpush.bf16.msra.mxu0 0
    %1229 = vmatpush.bf16.msra.mxu0 0
    %1230 = vmatpush.bf16.msra.mxu0 0
    %1231 = vmatpush.bf16.msra.mxu0 0
    %1232 = vmatpush.bf16.msra.mxu0 0
    %1233 = vmatpush.bf16.msra.mxu0 %v1221
    %1234 = vmatpush.bf16.msra.mxu0 %v1220
    %1235 = vmatmul.bf16.gmra.mxu0 %v1225
    %v1236 = vpop.f32.mrf.mxu0
    %v1237 = vadd.f32 %v1207, %v1236
    %v1238 = vpop.f32.mrf.mxu0
    %1239 = vdwg.mxu0
    %v1240 = vxor.u32 %v1237, 2147483648
    %v1241 = vmul.f32 %v1240, 1.442695
    %v1242 = vpow.pop %v1241
    %v1243 = vadd.f32 %v1242, 1.0
    %v1244 = vrcp.pop %v1243
    %v1245 = vmul.f32 %v1243, %v1244
    %v1246 = vsub.f32 1.0, %v1245
    %v1247 = vmul.f32 %v1244, %v1246
    %v1248 = vadd.f32 %v1244, %v1247
    %vm1249 = vweird.f32 %v1243
    %vm1250 = vweird.f32 %v1244
    %vm1251 = vmor %vm1249, %vm1250
    %v1252 = vsel %vm1251, %v1244, %v1248
    %v1253 = vand.u32 2147483647, %v1243
    %vm1254 = vcmp.eq.f32.partialorder %v1253, 8.507059e+37
    %v1255 = vand.u32 %v1243, 2147483648
    %v1256 = vor.u32 1.1754944e-38, %v1255
    %v1257 = vsel %vm1254, %v1256, %v1252
    %v1258 = vmul.f32 1.0, %v1257
    %v1259 = vpack.c.bf16 %v1258, %v1258
    %v1260 = vld [vmem:[%s7] sm:$0xf]
    %v1261 = vld [vmem:[%s7 + $0x4] sm:$0xf]
    %v1262 = vld [vmem:[%s8] sm:$0x1]
    %v1264 = vperm.slane %v1262, 0
    %v1268 = vunpack.c.l.b16 %v1260
    %v1269 = vunpack.c.l.b16 %v1261
    %v1270 = vpack.c.b16 %v1269, %v1268
    %vm1272 = vcmask 130048
    %v1274 = vsel %vm1272, %v1259, 0
    %1276 = vmatpush.bf16.msra.mxu0 0
    %1277 = vmatpush.bf16.msra.mxu0 0
    %1278 = vmatpush.bf16.msra.mxu0 0
    %1279 = vmatpush.bf16.msra.mxu0 0
    %1280 = vmatpush.bf16.msra.mxu0 0
    %1281 = vmatpush.bf16.msra.mxu0 0
    %1282 = vmatpush.bf16.msra.mxu0 0
    %1283 = vmatpush.bf16.msra.mxu0 %v1270
    %1284 = vmatmul.bf16.gmra.mxu0 %v1274
    %v1285 = vpop.f32.mrf.mxu0
    %v1286 = vadd.f32 %v1264, %v1285
    %v1287 = vpop.f32.mrf.mxu0
    %1288 = vdwg.mxu0
    %vm1289 = vcmask 33792
    %1290 = vst.msk [vmem:[#allocation2] sm:$0x3] %vm1289, %v1286
    // Predicated region
    $region38: #{easylstm_forward.1} parent=1 // pred_check
      _
    $region39: #{easylstm_forward.1} parent=1 // pred_check_branch
      %1292 = sbr.rel (0) target = $region41
    $region40: #{easylstm_forward.1} parent=1 // pred_region
      %1294 = vsyncadd [#allocation3], 0
      %s1296 = sshll.u32 [#allocation2], 4
      %s1297 = int_to_ptr.vmem [resolvable:$true] %s1296
      %s1298 = sshll.u32 %s9, 4
      %s1299 = int_to_ptr.hbm [resolvable:$true] %s1298
      %1301 = dma.vmem_to_hbm [thread:$0]  %s1297, 32, %s1299, [#allocation3]
    $region41: #{easylstm_forward.1} parent=1 // pred_fallthru
      _
    // Predicated region
    $region42: #{easylstm_forward.1} parent=1 // pred_check
      _
    $region43: #{easylstm_forward.1} parent=1 // pred_check_branch
      %1303 = sbr.rel (0) target = $region45
    $region44: #{easylstm_forward.1} parent=1 // pred_region
      %1305 = dma.done [#allocation3], 32
    $region45: #{easylstm_forward.1} parent=1 // pred_fallthru
      _
    %1306 = vsyncpa [#allocation3], 1

</llo_original>
